<compile_context>
chip_gen: v6e
topology: v6e:2x2x1
jax: 0.10.0
libtpu: 0.0.40
codegen_flags: <defaults>
</compile_context>

<pallas_src>
import functools

import jax
import jax.numpy as jnp
from jax.experimental import pallas as pl
from jax.experimental.pallas import tpu as pltpu


# ---------------------------------------------------------------------------
# Pallas kernel: both LSTM directions, grid = (direction, time-tile).
# ---------------------------------------------------------------------------
def _bilstm_kernel(x_ref, len_ref, wx_ref, wh_ref, b_ref,
                   out_ref, h_out_ref, c_out_ref,
                   xw_s, h_s, c_s, *, unroll):
    TT, B, E = x_ref.shape       # timesteps per tile, batch, embedding
    H = h_s.shape[-1]            # per-direction hidden size
    G = 4 * H

    d = pl.program_id(0)         # 0 = forward, 1 = backward
    s = pl.program_id(1)         # time-tile counter (always increasing)
    nT = pl.num_programs(1)
    # HBM time-block actually loaded for this step (reversed for backward dir).
    tb = s + d * (nT - 1 - 2 * s)

    @pl.when(s == 0)
    def _():
        h_s[...] = jnp.zeros_like(h_s)
        c_s[...] = jnp.zeros_like(c_s)

    # --- Hoisted input projection: one big MXU matmul + one bias add per tile.
    x2 = x_ref[...].reshape(TT * B, E)                       # bf16, M = TT*B rows
    xw = jnp.dot(x2, wx_ref[...], preferred_element_type=jnp.float32)
    xw_s[...] = xw.reshape(TT, B, G) + b_ref[...]            # f32 scratch (TT, B, 4H)

    wh = wh_ref[...]                                         # (H, 4H) bf16, resident
    lens = len_ref[...]                                      # (B, 1) int32, resident

    # Backward direction walks the tile back-to-front: local = base + sign * j
    base = d * (TT - 1)
    sign = 1 - 2 * d
    t0 = tb * TT

    def step(j, carry):
        h_prev, c_prev = carry
        local = base + sign * j

        gates = xw_s[local] + jnp.dot(h_prev.astype(jnp.bfloat16), wh,
                                      preferred_element_type=jnp.float32)

        i_g = jax.nn.sigmoid(gates[:, 0 * H:1 * H])
        f_g = jax.nn.sigmoid(gates[:, 1 * H:2 * H])
        g_g = jnp.tanh(gates[:, 2 * H:3 * H])
        o_g = jax.nn.sigmoid(gates[:, 3 * H:4 * H])

        c_new = f_g * c_prev + i_g * g_g
        h_new = o_g * jnp.tanh(c_new)

        # packed-sequence validity mask: global time index < length[b]
        valid = (t0 + local) < lens                          # (B, 1) bool
        h_cur = jnp.where(valid, h_new, h_prev)
        c_cur = jnp.where(valid, c_new, c_prev)

        out_ref[local] = jnp.where(valid, h_new, 0.0).astype(out_ref.dtype)
        return h_cur, c_cur

    h_fin, c_fin = jax.lax.fori_loop(
        0, TT, step, (h_s[...], c_s[...]), unroll=unroll)

    # carry across time tiles
    h_s[...] = h_fin
    c_s[...] = c_fin

    # final states: write only once, on the last time tile
    @pl.when(s == nT - 1)
    def _():
        h_out_ref[...] = h_fin.astype(h_out_ref.dtype)
        c_out_ref[...] = c_fin.astype(c_out_ref.dtype)


def _choose_time_tile(T, max_tile=32):
    # Fixed tile (multiple of 8); T is padded up to a multiple of it.
    return min(max_tile, ((T + 7) // 8) * 8)


def bilstm(emb_bf, lens2d, wx_bf, wh_bf, b, *, max_time_tile=32, max_unroll=8):
    """emb_bf: (T, B, E) bf16, lens2d: (B, 1) i32,
    wx_bf: (2, E, 4H) bf16, wh_bf: (2, H, 4H) bf16, b: (2, 1, 4H) f32.
    Returns out (T, B, 2H) f32, h (B, 2H) f32, c (B, 2H) f32."""
    T, B, E = emb_bf.shape
    H = wh_bf.shape[1]
    G = 4 * H

    TT = _choose_time_tile(T, max_time_tile)
    Tp = ((T + TT - 1) // TT) * TT
    if Tp != T:
        # Padded timesteps are neutralized by the length mask (never valid).
        emb_bf = jnp.pad(emb_bf, ((0, Tp - T), (0, 0), (0, 0)))
    nT = Tp // TT
    unroll = min(TT, max_unroll)

    def time_block(d, s):
        # forward: s ; backward: nT - 1 - s  (branch-free scalar arithmetic)
        return s + d * (nT - 1 - 2 * s)

    in_specs = [
        pl.BlockSpec((TT, B, E), lambda d, s: (time_block(d, s), 0, 0)),
        pl.BlockSpec((B, 1), lambda d, s: (0, 0)),
        pl.BlockSpec((None, E, G), lambda d, s: (d, 0, 0)),
        pl.BlockSpec((None, H, G), lambda d, s: (d, 0, 0)),
        pl.BlockSpec((None, 1, G), lambda d, s: (d, 0, 0)),
    ]

    # Direct (T, B, 2H) write needs a lane-aligned H (multiple of 128); otherwise
    # fall back to the per-direction layout and concatenate in the wrapper.
    direct = (H % 128 == 0)
    if direct:
        out_shapes = (jax.ShapeDtypeStruct((Tp, B, 2 * H), jnp.float32),
                      jax.ShapeDtypeStruct((B, 2 * H), jnp.float32),
                      jax.ShapeDtypeStruct((B, 2 * H), jnp.float32))
        out_specs = [
            pl.BlockSpec((TT, B, H), lambda d, s: (time_block(d, s), 0, d)),
            pl.BlockSpec((B, H), lambda d, s: (0, d)),
            pl.BlockSpec((B, H), lambda d, s: (0, d)),
        ]
    else:
        out_shapes = (jax.ShapeDtypeStruct((2, Tp, B, H), jnp.float32),
                      jax.ShapeDtypeStruct((2, B, H), jnp.float32),
                      jax.ShapeDtypeStruct((2, B, H), jnp.float32))
        out_specs = [
            pl.BlockSpec((None, TT, B, H),
                         lambda d, s: (d, time_block(d, s), 0, 0)),
            pl.BlockSpec((None, B, H), lambda d, s: (d, 0, 0)),
            pl.BlockSpec((None, B, H), lambda d, s: (d, 0, 0)),
        ]

    kernel = functools.partial(_bilstm_kernel, unroll=unroll)

    result = pl.pallas_call(
        kernel,
        out_shape=out_shapes,
        grid_spec=pltpu.PrefetchScalarGridSpec(
            num_scalar_prefetch=0,
            grid=(2, nT),
            in_specs=in_specs,
            out_specs=out_specs,
            scratch_shapes=[pltpu.VMEM((TT, B, G), jnp.float32),   # hoisted x@Wx + b
                            pltpu.VMEM((B, H), jnp.float32),       # h carry
                            pltpu.VMEM((B, H), jnp.float32)]),     # c carry
        compiler_params=pltpu.CompilerParams(
            # direction axis -> parallelizable; time axis is a recurrence.
            dimension_semantics=("parallel", "arbitrary"),
            vmem_limit_bytes=48 * 1024 * 1024),
    )(emb_bf, lens2d, wx_bf, wh_bf, b)

    if direct:
        out_cat, h_cat, c_cat = result
    else:
        out, h2, c2 = result
        out_cat = jnp.concatenate([out[0], out[1]], axis=-1)      # (Tp, B, 2H)
        h_cat = jnp.concatenate([h2[0], h2[1]], axis=-1)
        c_cat = jnp.concatenate([c2[0], c2[1]], axis=-1)

    return out_cat[:T], h_cat, c_cat


# ---------------------------------------------------------------------------
# LSTMEncoder forward (glue in plain JAX, recurrence in Pallas).
# ---------------------------------------------------------------------------
@jax.jit
def lstm_encoder_forward(params, tokens, input_len):
    """tokens: (T, B) int32 ids; input_len: (B,) int32 lengths.

    Returns (outputs, (h, c)) matching the PyTorch module:
      outputs: (T, B, 2H), h/c: (num_layers=1, B, 2H).
    """
    # bf16 embedding table -> gathered activations already in MXU dtype.
    emb = jnp.take(params["embedding"].astype(jnp.bfloat16), tokens, axis=0)
    # embedding_dropout: identity at eval time.

    T, B, _ = emb.shape
    # Pad batch to a multiple of 8 sublanes; padded rows get length 0 -> stay zero.
    Bp = ((B + 7) // 8) * 8
    lens = input_len.astype(jnp.int32)
    if Bp != B:
        emb = jnp.pad(emb, ((0, 0), (0, Bp - B), (0, 0)))
        lens = jnp.pad(lens, (0, Bp - B))
    lens2d = lens[:, None]                                    # (Bp, 1) int32

    out, h_cat, c_cat = bilstm(emb, lens2d,
                               params["wx"].astype(jnp.bfloat16),
                               params["wh"].astype(jnp.bfloat16),
                               params["b"])

    outputs = out[:, :B]                                      # (T, B, 2H)
    h = h_cat[:B][None]                                       # (1, B, 2H)
    c = c_cat[:B][None]                                       # (1, B, 2H)
    return outputs, (h, c)


# ---------------------------------------------------------------------------
# Pure-JAX reference (lax.scan) with the same bf16 MXU operands.
# ---------------------------------------------------------------------------
def _ref_direction(x_bf, mask, wx_bf, wh_bf, b):
    T, B, _ = x_bf.shape
    H = wh_bf.shape[0]
    # hoisted input projection (same operation order as the kernel)
    xw = jnp.einsum("tbe,eg->tbg", x_bf, wx_bf,
                    preferred_element_type=jnp.float32) + b   # (T, B, 4H) f32

    def step(carry, inp):
        h, c = carry
        xw_t, mt = inp
        g = xw_t + jnp.dot(h.astype(jnp.bfloat16), wh_bf,
                           preferred_element_type=jnp.float32)
        i = jax.nn.sigmoid(g[:, 0 * H:1 * H])
        f = jax.nn.sigmoid(g[:, 1 * H:2 * H])
        gg = jnp.tanh(g[:, 2 * H:3 * H])
        o = jax.nn.sigmoid(g[:, 3 * H:4 * H])
        c_new = f * c + i * gg
        h_new = o * jnp.tanh(c_new)
        h = jnp.where(mt, h_new, h)
        c = jnp.where(mt, c_new, c)
        return (h, c), jnp.where(mt, h_new, 0.0)

    init = (jnp.zeros((B, H), jnp.float32), jnp.zeros((B, H), jnp.float32))
    (hT, cT), outs = jax.lax.scan(step, init, (xw, mask))
    return outs, hT, cT


def _ref_forward(params, tokens, input_len):
    emb = jnp.take(params["embedding"].astype(jnp.bfloat16), tokens, axis=0)
    wx = params["wx"].astype(jnp.bfloat16)
    wh = params["wh"].astype(jnp.bfloat16)
    b = params["b"]
    T, B, _ = emb.shape
    t_idx = jnp.arange(T, dtype=jnp.int32)[:, None]
    mask = (t_idx < input_len[None, :])[..., None]            # (T, B, 1) bool
    of, hf, cf = _ref_direction(emb, mask, wx[0], wh[0], b[0])
    obr, hb, cb = _ref_direction(emb[::-1], mask[::-1], wx[1], wh[1], b[1])
    ob = obr[::-1]
    return (jnp.concatenate([of, ob], 2),
            (jnp.concatenate([hf, hb], -1)[None],
             jnp.concatenate([cf, cb], -1)[None]))


# ---------------------------------------------------------------------------
# Deterministic parameter init (shapes from the module __init__).
# ---------------------------------------------------------------------------
def init_params(key, vocab_size, embedding_size, lstm_hidden_size):
    H = lstm_hidden_size // 2   # per-direction hidden (bidirectional)
    E = embedding_size
    ks = jax.random.split(key, 4)
    scale = 1.0 / jnp.sqrt(H)
    u = lambda k, shape: jax.random.uniform(k, shape, jnp.float32, -scale, scale)
    return {
        "embedding": jax.random.normal(ks[0], (vocab_size, E), jnp.float32),
        # fused gate layout: [direction, in_dim, (i|f|g|o) * H]
        "wx": u(ks[1], (2, E, 4 * H)),
        "wh": u(ks[2], (2, H, 4 * H)),
        "b":  u(ks[3], (2, 1, 4 * H)),
    }


if __name__ == "__main__":
    # Small shapes: vocab=20, embedding=16, lstm_hidden_size=32 (-> H=16 per dir),
    # seq T=8, batch B=2 (time-major tokens (T, B) as in batch_first=False).
    VOCAB, E, HID, T, B = 20, 16, 32, 8, 2

    key = jax.random.PRNGKey(0)
    k_par, k_tok = jax.random.split(key)
    params = init_params(k_par, VOCAB, E, HID)

    tokens = jax.random.randint(k_tok, (T, B), 0, VOCAB, dtype=jnp.int32)
    input_len = jnp.array([T, 5], dtype=jnp.int32)   # max(len) == T

    outputs, (h, c) = lstm_encoder_forward(params, tokens, input_len)
    jax.block_until_ready((outputs, h, c))

    # Correctness check against the pure-JAX reference (same bf16 MXU operands).
    r_out, (r_h, r_c) = _ref_forward(params, tokens, input_len)
    assert outputs.shape == (T, B, HID) and h.shape == (1, B, HID) and c.shape == (1, B, HID)
    assert jnp.allclose(outputs, r_out, atol=2e-3)
    assert jnp.allclose(h, r_h, atol=2e-3)
    assert jnp.allclose(c, r_c, atol=2e-3)

    print("KERNEL_OK")
</pallas_src>

<mosaic_0001>
module attributes {stable_mosaic.version = 11 : i64} {
  func.func @_bilstm_kernel(%arg0: i32, %arg1: i32, %arg2: memref<8x8x16xbf16, #tpu.memory_space<vmem>>, %arg3: memref<8x1xi32, #tpu.memory_space<vmem>>, %arg4: memref<1x16x64xbf16, #tpu.memory_space<vmem>>, %arg5: memref<1x16x64xbf16, #tpu.memory_space<vmem>>, %arg6: memref<1x1x64xf32, #tpu.memory_space<vmem>>, %arg7: memref<1x8x8x16xf32, #tpu.memory_space<vmem>>, %arg8: memref<1x8x16xf32, #tpu.memory_space<vmem>>, %arg9: memref<1x8x16xf32, #tpu.memory_space<vmem>>, %arg10: memref<8x8x64xf32, #tpu.memory_space<vmem>>, %arg11: memref<8x16xf32, #tpu.memory_space<vmem>>, %arg12: memref<8x16xf32, #tpu.memory_space<vmem>>) attributes {dimension_semantics = [#tpu.dimension_semantics<parallel>, #tpu.dimension_semantics<arbitrary>], iteration_bounds = array<i64: 2, 1>, scalar_prefetch = 0 : i64, scratch_operands = 3 : i64, tpu.core_type = #tpu.core_type<tc>, window_params = [{transform_indices = @transform_0, window_bounds = array<i64: 8, 8, 16>}, {pipeline_mode = #tpu.pipeline_mode<synchronous>, transform_indices = @transform_1, window_bounds = array<i64: 8, 1>}, {transform_indices = @transform_2, window_bounds = array<i64: 1, 16, 64>}, {transform_indices = @transform_3, window_bounds = array<i64: 1, 16, 64>}, {transform_indices = @transform_4, window_bounds = array<i64: 1, 1, 64>}, {transform_indices = @transform_5, window_bounds = array<i64: 1, 8, 8, 16>}, {transform_indices = @transform_6, window_bounds = array<i64: 1, 8, 16>}, {transform_indices = @transform_7, window_bounds = array<i64: 1, 8, 16>}]} {
    %c2_i32 = arith.constant 2 : i32
    %0 = arith.muli %c2_i32, %arg1 : i32
    %c0_i32 = arith.constant 0 : i32
    %1 = arith.subi %c0_i32, %0 : i32
    %2 = arith.muli %arg0, %1 : i32
    %3 = arith.addi %arg1, %2 : i32
    %c0_i32_0 = arith.constant 0 : i32
    %4 = arith.cmpi eq, %arg1, %c0_i32_0 : i32
    %5 = arith.extui %4 : i1 to i32
    %c0_i32_1 = arith.constant 0 : i32
    %6 = arith.cmpi ne, %5, %c0_i32_1 : i32
    scf.if %6 {
      %cst_114 = arith.constant 0.000000e+00 : f32
      %433 = vector.broadcast %cst_114 : f32 to vector<8x16xf32>
      %c0_115 = arith.constant 0 : index
      %c0_116 = arith.constant 0 : index
      %434 = vector.load %arg11[%c0_115, %c0_116] : memref<8x16xf32, #tpu.memory_space<vmem>>, vector<8x16xf32>
      tpu.vector_store %arg11[%c0_115, %c0_116], %433 {strides = array<i32>} : memref<8x16xf32, #tpu.memory_space<vmem>>, vector<8x16xf32>,
      %cst_117 = arith.constant 0.000000e+00 : f32
      %435 = vector.broadcast %cst_117 : f32 to vector<8x16xf32>
      %c0_118 = arith.constant 0 : index
      %c0_119 = arith.constant 0 : index
      %436 = vector.load %arg12[%c0_118, %c0_119] : memref<8x16xf32, #tpu.memory_space<vmem>>, vector<8x16xf32>
      tpu.vector_store %arg12[%c0_118, %c0_119], %435 {strides = array<i32>} : memref<8x16xf32, #tpu.memory_space<vmem>>, vector<8x16xf32>,
    } else {
    }
    %c0 = arith.constant 0 : index
    %c0_2 = arith.constant 0 : index
    %c0_3 = arith.constant 0 : index
    %7 = vector.load %arg2[%c0, %c0_2, %c0_3] : memref<8x8x16xbf16, #tpu.memory_space<vmem>>, vector<8x8x16xbf16>
    %8 = vector.shape_cast %7 : vector<8x8x16xbf16> to vector<64x16xbf16>
    %c0_4 = arith.constant 0 : index
    %c0_5 = arith.constant 0 : index
    %c0_6 = arith.constant 0 : index
    %9 = vector.load %arg4[%c0_4, %c0_5, %c0_6] : memref<1x16x64xbf16, #tpu.memory_space<vmem>>, vector<1x16x64xbf16>
    %10 = vector.shape_cast %9 : vector<1x16x64xbf16> to vector<16x64xbf16>
    %cst = arith.constant dense<0.000000e+00> : vector<64x64xf32>
    %11 = tpu.matmul %8, %10, %cst {dimension_numbers = #tpu.dot_dimension_numbers<[1], [0], [0], [1], [0, 0, 1, 1], [], []>} : vector<64x16xbf16>, vector<16x64xbf16>, vector<64x64xf32> -> vector<64x64xf32>
    %12 = vector.shape_cast %11 : vector<64x64xf32> to vector<8x8x64xf32>
    %c0_7 = arith.constant 0 : index
    %c0_8 = arith.constant 0 : index
    %c0_9 = arith.constant 0 : index
    %13 = vector.load %arg6[%c0_7, %c0_8, %c0_9] : memref<1x1x64xf32, #tpu.memory_space<vmem>>, vector<1x1x64xf32>
    %14 = vector.shape_cast %13 : vector<1x1x64xf32> to vector<1x64xf32>
    %15 = vector.shape_cast %14 : vector<1x64xf32> to vector<1x1x64xf32>
    %16 = vector.broadcast %15 : vector<1x1x64xf32> to vector<8x8x64xf32>
    %17 = arith.addf %12, %16 : vector<8x8x64xf32>
    %c0_10 = arith.constant 0 : index
    %c0_11 = arith.constant 0 : index
    %c0_12 = arith.constant 0 : index
    %18 = vector.load %arg10[%c0_10, %c0_11, %c0_12] : memref<8x8x64xf32, #tpu.memory_space<vmem>>, vector<8x8x64xf32>
    tpu.vector_store %arg10[%c0_10, %c0_11, %c0_12], %17 {strides = array<i32>} : memref<8x8x64xf32, #tpu.memory_space<vmem>>, vector<8x8x64xf32>,
    %c0_13 = arith.constant 0 : index
    %c0_14 = arith.constant 0 : index
    %c0_15 = arith.constant 0 : index
    %19 = vector.load %arg5[%c0_13, %c0_14, %c0_15] : memref<1x16x64xbf16, #tpu.memory_space<vmem>>, vector<1x16x64xbf16>
    %20 = vector.shape_cast %19 : vector<1x16x64xbf16> to vector<16x64xbf16>
    %c0_16 = arith.constant 0 : index
    %c0_17 = arith.constant 0 : index
    %21 = vector.load %arg3[%c0_16, %c0_17] : memref<8x1xi32, #tpu.memory_space<vmem>>, vector<8x1xi32>
    %c7_i32 = arith.constant 7 : i32
    %22 = arith.muli %arg0, %c7_i32 : i32
    %c2_i32_18 = arith.constant 2 : i32
    %23 = arith.muli %c2_i32_18, %arg0 : i32
    %c1_i32 = arith.constant 1 : i32
    %24 = arith.subi %c1_i32, %23 : i32
    %c8_i32 = arith.constant 8 : i32
    %25 = arith.muli %3, %c8_i32 : i32
    %c0_19 = arith.constant 0 : index
    %c0_20 = arith.constant 0 : index
    %26 = vector.load %arg11[%c0_19, %c0_20] : memref<8x16xf32, #tpu.memory_space<vmem>>, vector<8x16xf32>
    %c0_21 = arith.constant 0 : index
    %c0_22 = arith.constant 0 : index
    %27 = vector.load %arg12[%c0_21, %c0_22] : memref<8x16xf32, #tpu.memory_space<vmem>>, vector<8x16xf32>
    %c0_i32_23 = arith.constant 0 : i32
    %28 = arith.muli %24, %c0_i32_23 : i32
    %29 = arith.addi %22, %28 : i32
    %30 = arith.index_cast %29 : i32 to index
    %c0_24 = arith.constant 0 : index
    %c0_25 = arith.constant 0 : index
    %31 = vector.load %arg10[%30, %c0_24, %c0_25] : memref<8x8x64xf32, #tpu.memory_space<vmem>>, vector<1x8x64xf32>
    %32 = vector.shape_cast %31 : vector<1x8x64xf32> to vector<8x64xf32>
    %33 = arith.truncf %26 : vector<8x16xf32> to vector<8x16xbf16>
    %cst_26 = arith.constant dense<0.000000e+00> : vector<8x64xf32>
    %34 = tpu.matmul %33, %20, %cst_26 {dimension_numbers = #tpu.dot_dimension_numbers<[1], [0], [0], [1], [0, 0, 1, 1], [], []>} : vector<8x16xbf16>, vector<16x64xbf16>, vector<8x64xf32> -> vector<8x64xf32>
    %35 = arith.addf %32, %34 : vector<8x64xf32>
    %36 = vector.extract_strided_slice %35 {offsets = [0, 0], sizes = [8, 16], strides = [1, 1]} : vector<8x64xf32> to vector<8x16xf32>
    %37 = arith.negf %36 : vector<8x16xf32>
    %38 = math.exp %37 : vector<8x16xf32>
    %cst_27 = arith.constant 1.000000e+00 : f32
    %39 = vector.broadcast %cst_27 : f32 to vector<8x16xf32>
    %40 = arith.addf %39, %38 : vector<8x16xf32>
    %41 = arith.divf %39, %40 : vector<8x16xf32>
    %42 = vector.extract_strided_slice %35 {offsets = [0, 16], sizes = [8, 16], strides = [1, 1]} : vector<8x64xf32> to vector<8x16xf32>
    %43 = arith.negf %42 : vector<8x16xf32>
    %44 = math.exp %43 : vector<8x16xf32>
    %cst_28 = arith.constant 1.000000e+00 : f32
    %45 = vector.broadcast %cst_28 : f32 to vector<8x16xf32>
    %46 = arith.addf %45, %44 : vector<8x16xf32>
    %47 = arith.divf %45, %46 : vector<8x16xf32>
    %48 = vector.extract_strided_slice %35 {offsets = [0, 32], sizes = [8, 16], strides = [1, 1]} : vector<8x64xf32> to vector<8x16xf32>
    %49 = math.tanh %48 : vector<8x16xf32>
    %50 = vector.extract_strided_slice %35 {offsets = [0, 48], sizes = [8, 16], strides = [1, 1]} : vector<8x64xf32> to vector<8x16xf32>
    %51 = arith.negf %50 : vector<8x16xf32>
    %52 = math.exp %51 : vector<8x16xf32>
    %cst_29 = arith.constant 1.000000e+00 : f32
    %53 = vector.broadcast %cst_29 : f32 to vector<8x16xf32>
    %54 = arith.addf %53, %52 : vector<8x16xf32>
    %55 = arith.divf %53, %54 : vector<8x16xf32>
    %56 = arith.mulf %47, %27 : vector<8x16xf32>
    %57 = arith.mulf %41, %49 : vector<8x16xf32>
    %58 = arith.addf %56, %57 : vector<8x16xf32>
    %59 = math.tanh %58 : vector<8x16xf32>
    %60 = arith.mulf %55, %59 : vector<8x16xf32>
    %61 = arith.addi %25, %29 : i32
    %62 = vector.broadcast %61 : i32 to vector<8x1xi32>
    %63 = arith.cmpi slt, %62, %21 : vector<8x1xi32>
    %64 = vector.shape_cast %63 : vector<8x1xi1> to vector<8x1xi1>
    %65 = vector.broadcast %64 : vector<8x1xi1> to vector<8x16xi1>
    %66 = arith.select %65, %60, %26 : vector<8x16xi1>, vector<8x16xf32>
    %67 = vector.shape_cast %63 : vector<8x1xi1> to vector<8x1xi1>
    %68 = vector.broadcast %67 : vector<8x1xi1> to vector<8x16xi1>
    %69 = arith.select %68, %58, %27 : vector<8x16xi1>, vector<8x16xf32>
    %cst_30 = arith.constant 0.000000e+00 : f32
    %70 = vector.shape_cast %63 : vector<8x1xi1> to vector<8x1xi1>
    %71 = vector.broadcast %70 : vector<8x1xi1> to vector<8x16xi1>
    %72 = vector.broadcast %cst_30 : f32 to vector<8x16xf32>
    %73 = arith.select %71, %60, %72 : vector<8x16xi1>, vector<8x16xf32>
    %c0_31 = arith.constant 0 : index
    %74 = arith.index_cast %29 : i32 to index
    %c0_32 = arith.constant 0 : index
    %c0_33 = arith.constant 0 : index
    %75 = vector.load %arg7[%c0_31, %74, %c0_32, %c0_33] : memref<1x8x8x16xf32, #tpu.memory_space<vmem>>, vector<1x1x8x16xf32>
    %76 = vector.shape_cast %75 : vector<1x1x8x16xf32> to vector<8x16xf32>
    %77 = vector.shape_cast %73 : vector<8x16xf32> to vector<1x1x8x16xf32>
    tpu.vector_store %arg7[%c0_31, %74, %c0_32, %c0_33], %77 {strides = array<i32>} : memref<1x8x8x16xf32, #tpu.memory_space<vmem>>, vector<1x1x8x16xf32>,
    %c1_i32_34 = arith.constant 1 : i32
    %78 = arith.muli %24, %c1_i32_34 : i32
    %79 = arith.addi %22, %78 : i32
    %80 = arith.index_cast %79 : i32 to index
    %c0_35 = arith.constant 0 : index
    %c0_36 = arith.constant 0 : index
    %81 = vector.load %arg10[%80, %c0_35, %c0_36] : memref<8x8x64xf32, #tpu.memory_space<vmem>>, vector<1x8x64xf32>
    %82 = vector.shape_cast %81 : vector<1x8x64xf32> to vector<8x64xf32>
    %83 = arith.truncf %66 : vector<8x16xf32> to vector<8x16xbf16>
    %cst_37 = arith.constant dense<0.000000e+00> : vector<8x64xf32>
    %84 = tpu.matmul %83, %20, %cst_37 {dimension_numbers = #tpu.dot_dimension_numbers<[1], [0], [0], [1], [0, 0, 1, 1], [], []>} : vector<8x16xbf16>, vector<16x64xbf16>, vector<8x64xf32> -> vector<8x64xf32>
    %85 = arith.addf %82, %84 : vector<8x64xf32>
    %86 = vector.extract_strided_slice %85 {offsets = [0, 0], sizes = [8, 16], strides = [1, 1]} : vector<8x64xf32> to vector<8x16xf32>
    %87 = arith.negf %86 : vector<8x16xf32>
    %88 = math.exp %87 : vector<8x16xf32>
    %cst_38 = arith.constant 1.000000e+00 : f32
    %89 = vector.broadcast %cst_38 : f32 to vector<8x16xf32>
    %90 = arith.addf %89, %88 : vector<8x16xf32>
    %91 = arith.divf %89, %90 : vector<8x16xf32>
    %92 = vector.extract_strided_slice %85 {offsets = [0, 16], sizes = [8, 16], strides = [1, 1]} : vector<8x64xf32> to vector<8x16xf32>
    %93 = arith.negf %92 : vector<8x16xf32>
    %94 = math.exp %93 : vector<8x16xf32>
    %cst_39 = arith.constant 1.000000e+00 : f32
    %95 = vector.broadcast %cst_39 : f32 to vector<8x16xf32>
    %96 = arith.addf %95, %94 : vector<8x16xf32>
    %97 = arith.divf %95, %96 : vector<8x16xf32>
    %98 = vector.extract_strided_slice %85 {offsets = [0, 32], sizes = [8, 16], strides = [1, 1]} : vector<8x64xf32> to vector<8x16xf32>
    %99 = math.tanh %98 : vector<8x16xf32>
    %100 = vector.extract_strided_slice %85 {offsets = [0, 48], sizes = [8, 16], strides = [1, 1]} : vector<8x64xf32> to vector<8x16xf32>
    %101 = arith.negf %100 : vector<8x16xf32>
    %102 = math.exp %101 : vector<8x16xf32>
    %cst_40 = arith.constant 1.000000e+00 : f32
    %103 = vector.broadcast %cst_40 : f32 to vector<8x16xf32>
    %104 = arith.addf %103, %102 : vector<8x16xf32>
    %105 = arith.divf %103, %104 : vector<8x16xf32>
    %106 = arith.mulf %97, %69 : vector<8x16xf32>
    %107 = arith.mulf %91, %99 : vector<8x16xf32>
    %108 = arith.addf %106, %107 : vector<8x16xf32>
    %109 = math.tanh %108 : vector<8x16xf32>
    %110 = arith.mulf %105, %109 : vector<8x16xf32>
    %111 = arith.addi %25, %79 : i32
    %112 = vector.broadcast %111 : i32 to vector<8x1xi32>
    %113 = arith.cmpi slt, %112, %21 : vector<8x1xi32>
    %114 = vector.shape_cast %113 : vector<8x1xi1> to vector<8x1xi1>
    %115 = vector.broadcast %114 : vector<8x1xi1> to vector<8x16xi1>
    %116 = arith.select %115, %110, %66 : vector<8x16xi1>, vector<8x16xf32>
    %117 = vector.shape_cast %113 : vector<8x1xi1> to vector<8x1xi1>
    %118 = vector.broadcast %117 : vector<8x1xi1> to vector<8x16xi1>
    %119 = arith.select %118, %108, %69 : vector<8x16xi1>, vector<8x16xf32>
    %cst_41 = arith.constant 0.000000e+00 : f32
    %120 = vector.shape_cast %113 : vector<8x1xi1> to vector<8x1xi1>
    %121 = vector.broadcast %120 : vector<8x1xi1> to vector<8x16xi1>
    %122 = vector.broadcast %cst_41 : f32 to vector<8x16xf32>
    %123 = arith.select %121, %110, %122 : vector<8x16xi1>, vector<8x16xf32>
    %c0_42 = arith.constant 0 : index
    %124 = arith.index_cast %79 : i32 to index
    %c0_43 = arith.constant 0 : index
    %c0_44 = arith.constant 0 : index
    %125 = vector.load %arg7[%c0_42, %124, %c0_43, %c0_44] : memref<1x8x8x16xf32, #tpu.memory_space<vmem>>, vector<1x1x8x16xf32>
    %126 = vector.shape_cast %125 : vector<1x1x8x16xf32> to vector<8x16xf32>
    %127 = vector.shape_cast %123 : vector<8x16xf32> to vector<1x1x8x16xf32>
    tpu.vector_store %arg7[%c0_42, %124, %c0_43, %c0_44], %127 {strides = array<i32>} : memref<1x8x8x16xf32, #tpu.memory_space<vmem>>, vector<1x1x8x16xf32>,
    %c2_i32_45 = arith.constant 2 : i32
    %128 = arith.muli %24, %c2_i32_45 : i32
    %129 = arith.addi %22, %128 : i32
    %130 = arith.index_cast %129 : i32 to index
    %c0_46 = arith.constant 0 : index
    %c0_47 = arith.constant 0 : index
    %131 = vector.load %arg10[%130, %c0_46, %c0_47] : memref<8x8x64xf32, #tpu.memory_space<vmem>>, vector<1x8x64xf32>
    %132 = vector.shape_cast %131 : vector<1x8x64xf32> to vector<8x64xf32>
    %133 = arith.truncf %116 : vector<8x16xf32> to vector<8x16xbf16>
    %cst_48 = arith.constant dense<0.000000e+00> : vector<8x64xf32>
    %134 = tpu.matmul %133, %20, %cst_48 {dimension_numbers = #tpu.dot_dimension_numbers<[1], [0], [0], [1], [0, 0, 1, 1], [], []>} : vector<8x16xbf16>, vector<16x64xbf16>, vector<8x64xf32> -> vector<8x64xf32>
    %135 = arith.addf %132, %134 : vector<8x64xf32>
    %136 = vector.extract_strided_slice %135 {offsets = [0, 0], sizes = [8, 16], strides = [1, 1]} : vector<8x64xf32> to vector<8x16xf32>
    %137 = arith.negf %136 : vector<8x16xf32>
    %138 = math.exp %137 : vector<8x16xf32>
    %cst_49 = arith.constant 1.000000e+00 : f32
    %139 = vector.broadcast %cst_49 : f32 to vector<8x16xf32>
    %140 = arith.addf %139, %138 : vector<8x16xf32>
    %141 = arith.divf %139, %140 : vector<8x16xf32>
    %142 = vector.extract_strided_slice %135 {offsets = [0, 16], sizes = [8, 16], strides = [1, 1]} : vector<8x64xf32> to vector<8x16xf32>
    %143 = arith.negf %142 : vector<8x16xf32>
    %144 = math.exp %143 : vector<8x16xf32>
    %cst_50 = arith.constant 1.000000e+00 : f32
    %145 = vector.broadcast %cst_50 : f32 to vector<8x16xf32>
    %146 = arith.addf %145, %144 : vector<8x16xf32>
    %147 = arith.divf %145, %146 : vector<8x16xf32>
    %148 = vector.extract_strided_slice %135 {offsets = [0, 32], sizes = [8, 16], strides = [1, 1]} : vector<8x64xf32> to vector<8x16xf32>
    %149 = math.tanh %148 : vector<8x16xf32>
    %150 = vector.extract_strided_slice %135 {offsets = [0, 48], sizes = [8, 16], strides = [1, 1]} : vector<8x64xf32> to vector<8x16xf32>
    %151 = arith.negf %150 : vector<8x16xf32>
    %152 = math.exp %151 : vector<8x16xf32>
    %cst_51 = arith.constant 1.000000e+00 : f32
    %153 = vector.broadcast %cst_51 : f32 to vector<8x16xf32>
    %154 = arith.addf %153, %152 : vector<8x16xf32>
    %155 = arith.divf %153, %154 : vector<8x16xf32>
    %156 = arith.mulf %147, %119 : vector<8x16xf32>
    %157 = arith.mulf %141, %149 : vector<8x16xf32>
    %158 = arith.addf %156, %157 : vector<8x16xf32>
    %159 = math.tanh %158 : vector<8x16xf32>
    %160 = arith.mulf %155, %159 : vector<8x16xf32>
    %161 = arith.addi %25, %129 : i32
    %162 = vector.broadcast %161 : i32 to vector<8x1xi32>
    %163 = arith.cmpi slt, %162, %21 : vector<8x1xi32>
    %164 = vector.shape_cast %163 : vector<8x1xi1> to vector<8x1xi1>
    %165 = vector.broadcast %164 : vector<8x1xi1> to vector<8x16xi1>
    %166 = arith.select %165, %160, %116 : vector<8x16xi1>, vector<8x16xf32>
    %167 = vector.shape_cast %163 : vector<8x1xi1> to vector<8x1xi1>
    %168 = vector.broadcast %167 : vector<8x1xi1> to vector<8x16xi1>
    %169 = arith.select %168, %158, %119 : vector<8x16xi1>, vector<8x16xf32>
    %cst_52 = arith.constant 0.000000e+00 : f32
    %170 = vector.shape_cast %163 : vector<8x1xi1> to vector<8x1xi1>
    %171 = vector.broadcast %170 : vector<8x1xi1> to vector<8x16xi1>
    %172 = vector.broadcast %cst_52 : f32 to vector<8x16xf32>
    %173 = arith.select %171, %160, %172 : vector<8x16xi1>, vector<8x16xf32>
    %c0_53 = arith.constant 0 : index
    %174 = arith.index_cast %129 : i32 to index
    %c0_54 = arith.constant 0 : index
    %c0_55 = arith.constant 0 : index
    %175 = vector.load %arg7[%c0_53, %174, %c0_54, %c0_55] : memref<1x8x8x16xf32, #tpu.memory_space<vmem>>, vector<1x1x8x16xf32>
    %176 = vector.shape_cast %175 : vector<1x1x8x16xf32> to vector<8x16xf32>
    %177 = vector.shape_cast %173 : vector<8x16xf32> to vector<1x1x8x16xf32>
    tpu.vector_store %arg7[%c0_53, %174, %c0_54, %c0_55], %177 {strides = array<i32>} : memref<1x8x8x16xf32, #tpu.memory_space<vmem>>, vector<1x1x8x16xf32>,
    %c3_i32 = arith.constant 3 : i32
    %178 = arith.muli %24, %c3_i32 : i32
    %179 = arith.addi %22, %178 : i32
    %180 = arith.index_cast %179 : i32 to index
    %c0_56 = arith.constant 0 : index
    %c0_57 = arith.constant 0 : index
    %181 = vector.load %arg10[%180, %c0_56, %c0_57] : memref<8x8x64xf32, #tpu.memory_space<vmem>>, vector<1x8x64xf32>
    %182 = vector.shape_cast %181 : vector<1x8x64xf32> to vector<8x64xf32>
    %183 = arith.truncf %166 : vector<8x16xf32> to vector<8x16xbf16>
    %cst_58 = arith.constant dense<0.000000e+00> : vector<8x64xf32>
    %184 = tpu.matmul %183, %20, %cst_58 {dimension_numbers = #tpu.dot_dimension_numbers<[1], [0], [0], [1], [0, 0, 1, 1], [], []>} : vector<8x16xbf16>, vector<16x64xbf16>, vector<8x64xf32> -> vector<8x64xf32>
    %185 = arith.addf %182, %184 : vector<8x64xf32>
    %186 = vector.extract_strided_slice %185 {offsets = [0, 0], sizes = [8, 16], strides = [1, 1]} : vector<8x64xf32> to vector<8x16xf32>
    %187 = arith.negf %186 : vector<8x16xf32>
    %188 = math.exp %187 : vector<8x16xf32>
    %cst_59 = arith.constant 1.000000e+00 : f32
    %189 = vector.broadcast %cst_59 : f32 to vector<8x16xf32>
    %190 = arith.addf %189, %188 : vector<8x16xf32>
    %191 = arith.divf %189, %190 : vector<8x16xf32>
    %192 = vector.extract_strided_slice %185 {offsets = [0, 16], sizes = [8, 16], strides = [1, 1]} : vector<8x64xf32> to vector<8x16xf32>
    %193 = arith.negf %192 : vector<8x16xf32>
    %194 = math.exp %193 : vector<8x16xf32>
    %cst_60 = arith.constant 1.000000e+00 : f32
    %195 = vector.broadcast %cst_60 : f32 to vector<8x16xf32>
    %196 = arith.addf %195, %194 : vector<8x16xf32>
    %197 = arith.divf %195, %196 : vector<8x16xf32>
    %198 = vector.extract_strided_slice %185 {offsets = [0, 32], sizes = [8, 16], strides = [1, 1]} : vector<8x64xf32> to vector<8x16xf32>
    %199 = math.tanh %198 : vector<8x16xf32>
    %200 = vector.extract_strided_slice %185 {offsets = [0, 48], sizes = [8, 16], strides = [1, 1]} : vector<8x64xf32> to vector<8x16xf32>
    %201 = arith.negf %200 : vector<8x16xf32>
    %202 = math.exp %201 : vector<8x16xf32>
    %cst_61 = arith.constant 1.000000e+00 : f32
    %203 = vector.broadcast %cst_61 : f32 to vector<8x16xf32>
    %204 = arith.addf %203, %202 : vector<8x16xf32>
    %205 = arith.divf %203, %204 : vector<8x16xf32>
    %206 = arith.mulf %197, %169 : vector<8x16xf32>
    %207 = arith.mulf %191, %199 : vector<8x16xf32>
    %208 = arith.addf %206, %207 : vector<8x16xf32>
    %209 = math.tanh %208 : vector<8x16xf32>
    %210 = arith.mulf %205, %209 : vector<8x16xf32>
    %211 = arith.addi %25, %179 : i32
    %212 = vector.broadcast %211 : i32 to vector<8x1xi32>
    %213 = arith.cmpi slt, %212, %21 : vector<8x1xi32>
    %214 = vector.shape_cast %213 : vector<8x1xi1> to vector<8x1xi1>
    %215 = vector.broadcast %214 : vector<8x1xi1> to vector<8x16xi1>
    %216 = arith.select %215, %210, %166 : vector<8x16xi1>, vector<8x16xf32>
    %217 = vector.shape_cast %213 : vector<8x1xi1> to vector<8x1xi1>
    %218 = vector.broadcast %217 : vector<8x1xi1> to vector<8x16xi1>
    %219 = arith.select %218, %208, %169 : vector<8x16xi1>, vector<8x16xf32>
    %cst_62 = arith.constant 0.000000e+00 : f32
    %220 = vector.shape_cast %213 : vector<8x1xi1> to vector<8x1xi1>
    %221 = vector.broadcast %220 : vector<8x1xi1> to vector<8x16xi1>
    %222 = vector.broadcast %cst_62 : f32 to vector<8x16xf32>
    %223 = arith.select %221, %210, %222 : vector<8x16xi1>, vector<8x16xf32>
    %c0_63 = arith.constant 0 : index
    %224 = arith.index_cast %179 : i32 to index
    %c0_64 = arith.constant 0 : index
    %c0_65 = arith.constant 0 : index
    %225 = vector.load %arg7[%c0_63, %224, %c0_64, %c0_65] : memref<1x8x8x16xf32, #tpu.memory_space<vmem>>, vector<1x1x8x16xf32>
    %226 = vector.shape_cast %225 : vector<1x1x8x16xf32> to vector<8x16xf32>
    %227 = vector.shape_cast %223 : vector<8x16xf32> to vector<1x1x8x16xf32>
    tpu.vector_store %arg7[%c0_63, %224, %c0_64, %c0_65], %227 {strides = array<i32>} : memref<1x8x8x16xf32, #tpu.memory_space<vmem>>, vector<1x1x8x16xf32>,
    %c4_i32 = arith.constant 4 : i32
    %228 = arith.muli %24, %c4_i32 : i32
    %229 = arith.addi %22, %228 : i32
    %230 = arith.index_cast %229 : i32 to index
    %c0_66 = arith.constant 0 : index
    %c0_67 = arith.constant 0 : index
    %231 = vector.load %arg10[%230, %c0_66, %c0_67] : memref<8x8x64xf32, #tpu.memory_space<vmem>>, vector<1x8x64xf32>
    %232 = vector.shape_cast %231 : vector<1x8x64xf32> to vector<8x64xf32>
    %233 = arith.truncf %216 : vector<8x16xf32> to vector<8x16xbf16>
    %cst_68 = arith.constant dense<0.000000e+00> : vector<8x64xf32>
    %234 = tpu.matmul %233, %20, %cst_68 {dimension_numbers = #tpu.dot_dimension_numbers<[1], [0], [0], [1], [0, 0, 1, 1], [], []>} : vector<8x16xbf16>, vector<16x64xbf16>, vector<8x64xf32> -> vector<8x64xf32>
    %235 = arith.addf %232, %234 : vector<8x64xf32>
    %236 = vector.extract_strided_slice %235 {offsets = [0, 0], sizes = [8, 16], strides = [1, 1]} : vector<8x64xf32> to vector<8x16xf32>
    %237 = arith.negf %236 : vector<8x16xf32>
    %238 = math.exp %237 : vector<8x16xf32>
    %cst_69 = arith.constant 1.000000e+00 : f32
    %239 = vector.broadcast %cst_69 : f32 to vector<8x16xf32>
    %240 = arith.addf %239, %238 : vector<8x16xf32>
    %241 = arith.divf %239, %240 : vector<8x16xf32>
    %242 = vector.extract_strided_slice %235 {offsets = [0, 16], sizes = [8, 16], strides = [1, 1]} : vector<8x64xf32> to vector<8x16xf32>
    %243 = arith.negf %242 : vector<8x16xf32>
    %244 = math.exp %243 : vector<8x16xf32>
    %cst_70 = arith.constant 1.000000e+00 : f32
    %245 = vector.broadcast %cst_70 : f32 to vector<8x16xf32>
    %246 = arith.addf %245, %244 : vector<8x16xf32>
    %247 = arith.divf %245, %246 : vector<8x16xf32>
    %248 = vector.extract_strided_slice %235 {offsets = [0, 32], sizes = [8, 16], strides = [1, 1]} : vector<8x64xf32> to vector<8x16xf32>
    %249 = math.tanh %248 : vector<8x16xf32>
    %250 = vector.extract_strided_slice %235 {offsets = [0, 48], sizes = [8, 16], strides = [1, 1]} : vector<8x64xf32> to vector<8x16xf32>
    %251 = arith.negf %250 : vector<8x16xf32>
    %252 = math.exp %251 : vector<8x16xf32>
    %cst_71 = arith.constant 1.000000e+00 : f32
    %253 = vector.broadcast %cst_71 : f32 to vector<8x16xf32>
    %254 = arith.addf %253, %252 : vector<8x16xf32>
    %255 = arith.divf %253, %254 : vector<8x16xf32>
    %256 = arith.mulf %247, %219 : vector<8x16xf32>
    %257 = arith.mulf %241, %249 : vector<8x16xf32>
    %258 = arith.addf %256, %257 : vector<8x16xf32>
    %259 = math.tanh %258 : vector<8x16xf32>
    %260 = arith.mulf %255, %259 : vector<8x16xf32>
    %261 = arith.addi %25, %229 : i32
    %262 = vector.broadcast %261 : i32 to vector<8x1xi32>
    %263 = arith.cmpi slt, %262, %21 : vector<8x1xi32>
    %264 = vector.shape_cast %263 : vector<8x1xi1> to vector<8x1xi1>
    %265 = vector.broadcast %264 : vector<8x1xi1> to vector<8x16xi1>
    %266 = arith.select %265, %260, %216 : vector<8x16xi1>, vector<8x16xf32>
    %267 = vector.shape_cast %263 : vector<8x1xi1> to vector<8x1xi1>
    %268 = vector.broadcast %267 : vector<8x1xi1> to vector<8x16xi1>
    %269 = arith.select %268, %258, %219 : vector<8x16xi1>, vector<8x16xf32>
    %cst_72 = arith.constant 0.000000e+00 : f32
    %270 = vector.shape_cast %263 : vector<8x1xi1> to vector<8x1xi1>
    %271 = vector.broadcast %270 : vector<8x1xi1> to vector<8x16xi1>
    %272 = vector.broadcast %cst_72 : f32 to vector<8x16xf32>
    %273 = arith.select %271, %260, %272 : vector<8x16xi1>, vector<8x16xf32>
    %c0_73 = arith.constant 0 : index
    %274 = arith.index_cast %229 : i32 to index
    %c0_74 = arith.constant 0 : index
    %c0_75 = arith.constant 0 : index
    %275 = vector.load %arg7[%c0_73, %274, %c0_74, %c0_75] : memref<1x8x8x16xf32, #tpu.memory_space<vmem>>, vector<1x1x8x16xf32>
    %276 = vector.shape_cast %275 : vector<1x1x8x16xf32> to vector<8x16xf32>
    %277 = vector.shape_cast %273 : vector<8x16xf32> to vector<1x1x8x16xf32>
    tpu.vector_store %arg7[%c0_73, %274, %c0_74, %c0_75], %277 {strides = array<i32>} : memref<1x8x8x16xf32, #tpu.memory_space<vmem>>, vector<1x1x8x16xf32>,
    %c5_i32 = arith.constant 5 : i32
    %278 = arith.muli %24, %c5_i32 : i32
    %279 = arith.addi %22, %278 : i32
    %280 = arith.index_cast %279 : i32 to index
    %c0_76 = arith.constant 0 : index
    %c0_77 = arith.constant 0 : index
    %281 = vector.load %arg10[%280, %c0_76, %c0_77] : memref<8x8x64xf32, #tpu.memory_space<vmem>>, vector<1x8x64xf32>
    %282 = vector.shape_cast %281 : vector<1x8x64xf32> to vector<8x64xf32>
    %283 = arith.truncf %266 : vector<8x16xf32> to vector<8x16xbf16>
    %cst_78 = arith.constant dense<0.000000e+00> : vector<8x64xf32>
    %284 = tpu.matmul %283, %20, %cst_78 {dimension_numbers = #tpu.dot_dimension_numbers<[1], [0], [0], [1], [0, 0, 1, 1], [], []>} : vector<8x16xbf16>, vector<16x64xbf16>, vector<8x64xf32> -> vector<8x64xf32>
    %285 = arith.addf %282, %284 : vector<8x64xf32>
    %286 = vector.extract_strided_slice %285 {offsets = [0, 0], sizes = [8, 16], strides = [1, 1]} : vector<8x64xf32> to vector<8x16xf32>
    %287 = arith.negf %286 : vector<8x16xf32>
    %288 = math.exp %287 : vector<8x16xf32>
    %cst_79 = arith.constant 1.000000e+00 : f32
    %289 = vector.broadcast %cst_79 : f32 to vector<8x16xf32>
    %290 = arith.addf %289, %288 : vector<8x16xf32>
    %291 = arith.divf %289, %290 : vector<8x16xf32>
    %292 = vector.extract_strided_slice %285 {offsets = [0, 16], sizes = [8, 16], strides = [1, 1]} : vector<8x64xf32> to vector<8x16xf32>
    %293 = arith.negf %292 : vector<8x16xf32>
    %294 = math.exp %293 : vector<8x16xf32>
    %cst_80 = arith.constant 1.000000e+00 : f32
    %295 = vector.broadcast %cst_80 : f32 to vector<8x16xf32>
    %296 = arith.addf %295, %294 : vector<8x16xf32>
    %297 = arith.divf %295, %296 : vector<8x16xf32>
    %298 = vector.extract_strided_slice %285 {offsets = [0, 32], sizes = [8, 16], strides = [1, 1]} : vector<8x64xf32> to vector<8x16xf32>
    %299 = math.tanh %298 : vector<8x16xf32>
    %300 = vector.extract_strided_slice %285 {offsets = [0, 48], sizes = [8, 16], strides = [1, 1]} : vector<8x64xf32> to vector<8x16xf32>
    %301 = arith.negf %300 : vector<8x16xf32>
    %302 = math.exp %301 : vector<8x16xf32>
    %cst_81 = arith.constant 1.000000e+00 : f32
    %303 = vector.broadcast %cst_81 : f32 to vector<8x16xf32>
    %304 = arith.addf %303, %302 : vector<8x16xf32>
    %305 = arith.divf %303, %304 : vector<8x16xf32>
    %306 = arith.mulf %297, %269 : vector<8x16xf32>
    %307 = arith.mulf %291, %299 : vector<8x16xf32>
    %308 = arith.addf %306, %307 : vector<8x16xf32>
    %309 = math.tanh %308 : vector<8x16xf32>
    %310 = arith.mulf %305, %309 : vector<8x16xf32>
    %311 = arith.addi %25, %279 : i32
    %312 = vector.broadcast %311 : i32 to vector<8x1xi32>
    %313 = arith.cmpi slt, %312, %21 : vector<8x1xi32>
    %314 = vector.shape_cast %313 : vector<8x1xi1> to vector<8x1xi1>
    %315 = vector.broadcast %314 : vector<8x1xi1> to vector<8x16xi1>
    %316 = arith.select %315, %310, %266 : vector<8x16xi1>, vector<8x16xf32>
    %317 = vector.shape_cast %313 : vector<8x1xi1> to vector<8x1xi1>
    %318 = vector.broadcast %317 : vector<8x1xi1> to vector<8x16xi1>
    %319 = arith.select %318, %308, %269 : vector<8x16xi1>, vector<8x16xf32>
    %cst_82 = arith.constant 0.000000e+00 : f32
    %320 = vector.shape_cast %313 : vector<8x1xi1> to vector<8x1xi1>
    %321 = vector.broadcast %320 : vector<8x1xi1> to vector<8x16xi1>
    %322 = vector.broadcast %cst_82 : f32 to vector<8x16xf32>
    %323 = arith.select %321, %310, %322 : vector<8x16xi1>, vector<8x16xf32>
    %c0_83 = arith.constant 0 : index
    %324 = arith.index_cast %279 : i32 to index
    %c0_84 = arith.constant 0 : index
    %c0_85 = arith.constant 0 : index
    %325 = vector.load %arg7[%c0_83, %324, %c0_84, %c0_85] : memref<1x8x8x16xf32, #tpu.memory_space<vmem>>, vector<1x1x8x16xf32>
    %326 = vector.shape_cast %325 : vector<1x1x8x16xf32> to vector<8x16xf32>
    %327 = vector.shape_cast %323 : vector<8x16xf32> to vector<1x1x8x16xf32>
    tpu.vector_store %arg7[%c0_83, %324, %c0_84, %c0_85], %327 {strides = array<i32>} : memref<1x8x8x16xf32, #tpu.memory_space<vmem>>, vector<1x1x8x16xf32>,
    %c6_i32 = arith.constant 6 : i32
    %328 = arith.muli %24, %c6_i32 : i32
    %329 = arith.addi %22, %328 : i32
    %330 = arith.index_cast %329 : i32 to index
    %c0_86 = arith.constant 0 : index
    %c0_87 = arith.constant 0 : index
    %331 = vector.load %arg10[%330, %c0_86, %c0_87] : memref<8x8x64xf32, #tpu.memory_space<vmem>>, vector<1x8x64xf32>
    %332 = vector.shape_cast %331 : vector<1x8x64xf32> to vector<8x64xf32>
    %333 = arith.truncf %316 : vector<8x16xf32> to vector<8x16xbf16>
    %cst_88 = arith.constant dense<0.000000e+00> : vector<8x64xf32>
    %334 = tpu.matmul %333, %20, %cst_88 {dimension_numbers = #tpu.dot_dimension_numbers<[1], [0], [0], [1], [0, 0, 1, 1], [], []>} : vector<8x16xbf16>, vector<16x64xbf16>, vector<8x64xf32> -> vector<8x64xf32>
    %335 = arith.addf %332, %334 : vector<8x64xf32>
    %336 = vector.extract_strided_slice %335 {offsets = [0, 0], sizes = [8, 16], strides = [1, 1]} : vector<8x64xf32> to vector<8x16xf32>
    %337 = arith.negf %336 : vector<8x16xf32>
    %338 = math.exp %337 : vector<8x16xf32>
    %cst_89 = arith.constant 1.000000e+00 : f32
    %339 = vector.broadcast %cst_89 : f32 to vector<8x16xf32>
    %340 = arith.addf %339, %338 : vector<8x16xf32>
    %341 = arith.divf %339, %340 : vector<8x16xf32>
    %342 = vector.extract_strided_slice %335 {offsets = [0, 16], sizes = [8, 16], strides = [1, 1]} : vector<8x64xf32> to vector<8x16xf32>
    %343 = arith.negf %342 : vector<8x16xf32>
    %344 = math.exp %343 : vector<8x16xf32>
    %cst_90 = arith.constant 1.000000e+00 : f32
    %345 = vector.broadcast %cst_90 : f32 to vector<8x16xf32>
    %346 = arith.addf %345, %344 : vector<8x16xf32>
    %347 = arith.divf %345, %346 : vector<8x16xf32>
    %348 = vector.extract_strided_slice %335 {offsets = [0, 32], sizes = [8, 16], strides = [1, 1]} : vector<8x64xf32> to vector<8x16xf32>
    %349 = math.tanh %348 : vector<8x16xf32>
    %350 = vector.extract_strided_slice %335 {offsets = [0, 48], sizes = [8, 16], strides = [1, 1]} : vector<8x64xf32> to vector<8x16xf32>
    %351 = arith.negf %350 : vector<8x16xf32>
    %352 = math.exp %351 : vector<8x16xf32>
    %cst_91 = arith.constant 1.000000e+00 : f32
    %353 = vector.broadcast %cst_91 : f32 to vector<8x16xf32>
    %354 = arith.addf %353, %352 : vector<8x16xf32>
    %355 = arith.divf %353, %354 : vector<8x16xf32>
    %356 = arith.mulf %347, %319 : vector<8x16xf32>
    %357 = arith.mulf %341, %349 : vector<8x16xf32>
    %358 = arith.addf %356, %357 : vector<8x16xf32>
    %359 = math.tanh %358 : vector<8x16xf32>
    %360 = arith.mulf %355, %359 : vector<8x16xf32>
    %361 = arith.addi %25, %329 : i32
    %362 = vector.broadcast %361 : i32 to vector<8x1xi32>
    %363 = arith.cmpi slt, %362, %21 : vector<8x1xi32>
    %364 = vector.shape_cast %363 : vector<8x1xi1> to vector<8x1xi1>
    %365 = vector.broadcast %364 : vector<8x1xi1> to vector<8x16xi1>
    %366 = arith.select %365, %360, %316 : vector<8x16xi1>, vector<8x16xf32>
    %367 = vector.shape_cast %363 : vector<8x1xi1> to vector<8x1xi1>
    %368 = vector.broadcast %367 : vector<8x1xi1> to vector<8x16xi1>
    %369 = arith.select %368, %358, %319 : vector<8x16xi1>, vector<8x16xf32>
    %cst_92 = arith.constant 0.000000e+00 : f32
    %370 = vector.shape_cast %363 : vector<8x1xi1> to vector<8x1xi1>
    %371 = vector.broadcast %370 : vector<8x1xi1> to vector<8x16xi1>
    %372 = vector.broadcast %cst_92 : f32 to vector<8x16xf32>
    %373 = arith.select %371, %360, %372 : vector<8x16xi1>, vector<8x16xf32>
    %c0_93 = arith.constant 0 : index
    %374 = arith.index_cast %329 : i32 to index
    %c0_94 = arith.constant 0 : index
    %c0_95 = arith.constant 0 : index
    %375 = vector.load %arg7[%c0_93, %374, %c0_94, %c0_95] : memref<1x8x8x16xf32, #tpu.memory_space<vmem>>, vector<1x1x8x16xf32>
    %376 = vector.shape_cast %375 : vector<1x1x8x16xf32> to vector<8x16xf32>
    %377 = vector.shape_cast %373 : vector<8x16xf32> to vector<1x1x8x16xf32>
    tpu.vector_store %arg7[%c0_93, %374, %c0_94, %c0_95], %377 {strides = array<i32>} : memref<1x8x8x16xf32, #tpu.memory_space<vmem>>, vector<1x1x8x16xf32>,
    %c7_i32_96 = arith.constant 7 : i32
    %378 = arith.muli %24, %c7_i32_96 : i32
    %379 = arith.addi %22, %378 : i32
    %380 = arith.index_cast %379 : i32 to index
    %c0_97 = arith.constant 0 : index
    %c0_98 = arith.constant 0 : index
    %381 = vector.load %arg10[%380, %c0_97, %c0_98] : memref<8x8x64xf32, #tpu.memory_space<vmem>>, vector<1x8x64xf32>
    %382 = vector.shape_cast %381 : vector<1x8x64xf32> to vector<8x64xf32>
    %383 = arith.truncf %366 : vector<8x16xf32> to vector<8x16xbf16>
    %cst_99 = arith.constant dense<0.000000e+00> : vector<8x64xf32>
    %384 = tpu.matmul %383, %20, %cst_99 {dimension_numbers = #tpu.dot_dimension_numbers<[1], [0], [0], [1], [0, 0, 1, 1], [], []>} : vector<8x16xbf16>, vector<16x64xbf16>, vector<8x64xf32> -> vector<8x64xf32>
    %385 = arith.addf %382, %384 : vector<8x64xf32>
    %386 = vector.extract_strided_slice %385 {offsets = [0, 0], sizes = [8, 16], strides = [1, 1]} : vector<8x64xf32> to vector<8x16xf32>
    %387 = arith.negf %386 : vector<8x16xf32>
    %388 = math.exp %387 : vector<8x16xf32>
    %cst_100 = arith.constant 1.000000e+00 : f32
    %389 = vector.broadcast %cst_100 : f32 to vector<8x16xf32>
    %390 = arith.addf %389, %388 : vector<8x16xf32>
    %391 = arith.divf %389, %390 : vector<8x16xf32>
    %392 = vector.extract_strided_slice %385 {offsets = [0, 16], sizes = [8, 16], strides = [1, 1]} : vector<8x64xf32> to vector<8x16xf32>
    %393 = arith.negf %392 : vector<8x16xf32>
    %394 = math.exp %393 : vector<8x16xf32>
    %cst_101 = arith.constant 1.000000e+00 : f32
    %395 = vector.broadcast %cst_101 : f32 to vector<8x16xf32>
    %396 = arith.addf %395, %394 : vector<8x16xf32>
    %397 = arith.divf %395, %396 : vector<8x16xf32>
    %398 = vector.extract_strided_slice %385 {offsets = [0, 32], sizes = [8, 16], strides = [1, 1]} : vector<8x64xf32> to vector<8x16xf32>
    %399 = math.tanh %398 : vector<8x16xf32>
    %400 = vector.extract_strided_slice %385 {offsets = [0, 48], sizes = [8, 16], strides = [1, 1]} : vector<8x64xf32> to vector<8x16xf32>
    %401 = arith.negf %400 : vector<8x16xf32>
    %402 = math.exp %401 : vector<8x16xf32>
    %cst_102 = arith.constant 1.000000e+00 : f32
    %403 = vector.broadcast %cst_102 : f32 to vector<8x16xf32>
    %404 = arith.addf %403, %402 : vector<8x16xf32>
    %405 = arith.divf %403, %404 : vector<8x16xf32>
    %406 = arith.mulf %397, %369 : vector<8x16xf32>
    %407 = arith.mulf %391, %399 : vector<8x16xf32>
    %408 = arith.addf %406, %407 : vector<8x16xf32>
    %409 = math.tanh %408 : vector<8x16xf32>
    %410 = arith.mulf %405, %409 : vector<8x16xf32>
    %411 = arith.addi %25, %379 : i32
    %412 = vector.broadcast %411 : i32 to vector<8x1xi32>
    %413 = arith.cmpi slt, %412, %21 : vector<8x1xi32>
    %414 = vector.shape_cast %413 : vector<8x1xi1> to vector<8x1xi1>
    %415 = vector.broadcast %414 : vector<8x1xi1> to vector<8x16xi1>
    %416 = arith.select %415, %410, %366 : vector<8x16xi1>, vector<8x16xf32>
    %417 = vector.shape_cast %413 : vector<8x1xi1> to vector<8x1xi1>
    %418 = vector.broadcast %417 : vector<8x1xi1> to vector<8x16xi1>
    %419 = arith.select %418, %408, %369 : vector<8x16xi1>, vector<8x16xf32>
    %cst_103 = arith.constant 0.000000e+00 : f32
    %420 = vector.shape_cast %413 : vector<8x1xi1> to vector<8x1xi1>
    %421 = vector.broadcast %420 : vector<8x1xi1> to vector<8x16xi1>
    %422 = vector.broadcast %cst_103 : f32 to vector<8x16xf32>
    %423 = arith.select %421, %410, %422 : vector<8x16xi1>, vector<8x16xf32>
    %c0_104 = arith.constant 0 : index
    %424 = arith.index_cast %379 : i32 to index
    %c0_105 = arith.constant 0 : index
    %c0_106 = arith.constant 0 : index
    %425 = vector.load %arg7[%c0_104, %424, %c0_105, %c0_106] : memref<1x8x8x16xf32, #tpu.memory_space<vmem>>, vector<1x1x8x16xf32>
    %426 = vector.shape_cast %425 : vector<1x1x8x16xf32> to vector<8x16xf32>
    %427 = vector.shape_cast %423 : vector<8x16xf32> to vector<1x1x8x16xf32>
    tpu.vector_store %arg7[%c0_104, %424, %c0_105, %c0_106], %427 {strides = array<i32>} : memref<1x8x8x16xf32, #tpu.memory_space<vmem>>, vector<1x1x8x16xf32>,
    %c8_i32_107 = arith.constant 8 : i32
    %c0_108 = arith.constant 0 : index
    %c0_109 = arith.constant 0 : index
    %428 = vector.load %arg11[%c0_108, %c0_109] : memref<8x16xf32, #tpu.memory_space<vmem>>, vector<8x16xf32>
    tpu.vector_store %arg11[%c0_108, %c0_109], %416 {strides = array<i32>} : memref<8x16xf32, #tpu.memory_space<vmem>>, vector<8x16xf32>,
    %c0_110 = arith.constant 0 : index
    %c0_111 = arith.constant 0 : index
    %429 = vector.load %arg12[%c0_110, %c0_111] : memref<8x16xf32, #tpu.memory_space<vmem>>, vector<8x16xf32>
    tpu.vector_store %arg12[%c0_110, %c0_111], %419 {strides = array<i32>} : memref<8x16xf32, #tpu.memory_space<vmem>>, vector<8x16xf32>,
    %c0_i32_112 = arith.constant 0 : i32
    %430 = arith.cmpi eq, %arg1, %c0_i32_112 : i32
    %431 = arith.extui %430 : i1 to i32
    %c0_i32_113 = arith.constant 0 : i32
    %432 = arith.cmpi ne, %431, %c0_i32_113 : i32
    scf.if %432 {
      %c0_114 = arith.constant 0 : index
      %c0_115 = arith.constant 0 : index
      %c0_116 = arith.constant 0 : index
      %433 = vector.load %arg8[%c0_114, %c0_115, %c0_116] : memref<1x8x16xf32, #tpu.memory_space<vmem>>, vector<1x8x16xf32>
      %434 = vector.shape_cast %433 : vector<1x8x16xf32> to vector<8x16xf32>
      %435 = vector.shape_cast %416 : vector<8x16xf32> to vector<1x8x16xf32>
      tpu.vector_store %arg8[%c0_114, %c0_115, %c0_116], %435 {strides = array<i32>} : memref<1x8x16xf32, #tpu.memory_space<vmem>>, vector<1x8x16xf32>,
      %c0_117 = arith.constant 0 : index
      %c0_118 = arith.constant 0 : index
      %c0_119 = arith.constant 0 : index
      %436 = vector.load %arg9[%c0_117, %c0_118, %c0_119] : memref<1x8x16xf32, #tpu.memory_space<vmem>>, vector<1x8x16xf32>
      %437 = vector.shape_cast %436 : vector<1x8x16xf32> to vector<8x16xf32>
      %438 = vector.shape_cast %419 : vector<8x16xf32> to vector<1x8x16xf32>
      tpu.vector_store %arg9[%c0_117, %c0_118, %c0_119], %438 {strides = array<i32>} : memref<1x8x16xf32, #tpu.memory_space<vmem>>, vector<1x8x16xf32>,
    } else {
    }
    return
  }
  func.func @transform_0(%arg0: i32, %arg1: i32) -> (i32, i32, i32) {
    %c2_i32 = arith.constant 2 : i32
    %0 = arith.muli %c2_i32, %arg1 : i32
    %c0_i32 = arith.constant 0 : i32
    %1 = arith.subi %c0_i32, %0 : i32
    %2 = arith.muli %arg0, %1 : i32
    %3 = arith.addi %arg1, %2 : i32
    %c0_i32_0 = arith.constant 0 : i32
    %c0_i32_1 = arith.constant 0 : i32
    %c0_i32_2 = arith.constant 0 : i32
    return %3, %c0_i32_0, %c0_i32_1 : i32, i32, i32
  }
  func.func @transform_1(%arg0: i32, %arg1: i32) -> (i32, i32) {
    %c0_i32 = arith.constant 0 : i32
    %c0_i32_0 = arith.constant 0 : i32
    %c0_i32_1 = arith.constant 0 : i32
    return %c0_i32, %c0_i32_0 : i32, i32
  }
  func.func @transform_2(%arg0: i32, %arg1: i32) -> (i32, i32, i32) {
    %c0_i32 = arith.constant 0 : i32
    %c0_i32_0 = arith.constant 0 : i32
    %c0_i32_1 = arith.constant 0 : i32
    return %arg0, %c0_i32, %c0_i32_0 : i32, i32, i32
  }
  func.func @transform_3(%arg0: i32, %arg1: i32) -> (i32, i32, i32) {
    %c0_i32 = arith.constant 0 : i32
    %c0_i32_0 = arith.constant 0 : i32
    %c0_i32_1 = arith.constant 0 : i32
    return %arg0, %c0_i32, %c0_i32_0 : i32, i32, i32
  }
  func.func @transform_4(%arg0: i32, %arg1: i32) -> (i32, i32, i32) {
    %c0_i32 = arith.constant 0 : i32
    %c0_i32_0 = arith.constant 0 : i32
    %c0_i32_1 = arith.constant 0 : i32
    return %arg0, %c0_i32, %c0_i32_0 : i32, i32, i32
  }
  func.func @transform_5(%arg0: i32, %arg1: i32) -> (i32, i32, i32, i32) {
    %c2_i32 = arith.constant 2 : i32
    %0 = arith.muli %c2_i32, %arg1 : i32
    %c0_i32 = arith.constant 0 : i32
    %1 = arith.subi %c0_i32, %0 : i32
    %2 = arith.muli %arg0, %1 : i32
    %3 = arith.addi %arg1, %2 : i32
    %c0_i32_0 = arith.constant 0 : i32
    %c0_i32_1 = arith.constant 0 : i32
    %c0_i32_2 = arith.constant 0 : i32
    return %arg0, %3, %c0_i32_0, %c0_i32_1 : i32, i32, i32, i32
  }
  func.func @transform_6(%arg0: i32, %arg1: i32) -> (i32, i32, i32) {
    %c0_i32 = arith.constant 0 : i32
    %c0_i32_0 = arith.constant 0 : i32
    %c0_i32_1 = arith.constant 0 : i32
    return %arg0, %c0_i32, %c0_i32_0 : i32, i32, i32
  }
  func.func @transform_7(%arg0: i32, %arg1: i32) -> (i32, i32, i32) {
    %c0_i32 = arith.constant 0 : i32
    %c0_i32_0 = arith.constant 0 : i32
    %c0_i32_1 = arith.constant 0 : i32
    return %arg0, %c0_i32, %c0_i32_0 : i32, i32, i32
  }
}

</mosaic_0001>

<llo_original>
// kernel: lstm_encoder_forward.1
$region0: #{lstm_encoder_forward.1}
  #allocation0 [shape = 'u32[]', space=smem, size = 0x4, offset = 0x4, fixed_abs, tag = 'smem constant byte address 0x4 - core index']
  #allocation1 [shape = 'u32[144,128]{1,0:T(1,128)}', space=vmem, size = 0x12000, scoped, tag = 'internal scratch']
  #allocation2 [shape = 'f32[8,8,64]{2,1,0:T(8,128)}', space=vmem, size = 0x8000, scoped, tag = 'scratch operand']
  #allocation3 [shape = 'f32[8,16]{1,0:T(8,128)}', space=vmem, size = 0x1000, scoped, tag = 'scratch operand']
  #allocation4 [shape = 'f32[8,16]{1,0:T(8,128)}', space=vmem, size = 0x1000, scoped, tag = 'scratch operand']
  %s0 = inlined_call_operand.vmem [shape: bf16[8,8,16], index: 0, kind: input, shape index: {}]
  %s1 = inlined_call_operand.vmem [shape: s32[8,1], index: 1, kind: input, shape index: {}]
  %s2 = inlined_call_operand.vmem [shape: bf16[2,16,64], index: 2, kind: input, shape index: {}]
  %s3 = inlined_call_operand.vmem [shape: bf16[2,16,64], index: 3, kind: input, shape index: {}]
  %s4 = inlined_call_operand.vmem [shape: f32[2,1,64], index: 4, kind: input, shape index: {}]
  %s5 = inlined_call_operand.vmem [shape: f32[2,8,8,16], index: 5, kind: output, shape index: {0}]
  %s6 = inlined_call_operand.vmem [shape: f32[2,8,16], index: 6, kind: output, shape index: {1}]
  %s7 = inlined_call_operand.vmem [shape: f32[2,8,16], index: 7, kind: output, shape index: {2}]
  %8 = xla_tuple %s5, %s6, %s7
  %s9 = sld [smem:[#allocation0]]
  $region77: #{lstm_encoder_forward.1} parent=0
    _
  %s11 = ssub.s32 1, %s9
  %s12 = scalar_select 0, %s11, %s9
  loop: start=0, step=1, limit=4
  $region2: #{lstm_encoder_forward.1} parent=0 // loop_pre_header
    _
  $region3: #{lstm_encoder_forward.1} parent=0 // loop_header
    %s14 = sphi 0, %s18
    %p15 = scmp.ge.s32.totalorder %s14, 4
    %s21 = sphi 0, %s33
    %s22 = sphi 0, %s29
    %s23 = sphi 0, %s21
    %s24 = sphi 0, %s22
    %s25 = sphi 0, %s23
    %s26 = sphi 0, %s24
    %s44 = sphi 0, %s46
    %s47 = sphi 0, %s44
    %s48 = sphi 0, %s47
    %s64 = sphi 0, %s48
    %s68 = sphi 0, %s68
    %s70 = sphi 0, %s68
    %s71 = sphi 0, %s70
    %s85 = sphi 0, %s71
    %s91 = sphi 0, %s93
    %s94 = sphi 0, %s91
    %s95 = sphi 0, %s94
    %s111 = sphi 0, %s95
    %s117 = sphi 0, %s119
    %s120 = sphi 0, %s117
    %s121 = sphi 0, %s120
    %s137 = sphi 0, %s121
    %s143 = sphi 0, %s145
    %s146 = sphi 0, %s143
    %s147 = sphi 0, %s146
    %s163 = sphi 0, %s147
    %s179 = sphi 0, %s181
    %s182 = sphi 0, %s179
    %s183 = sphi 0, %s182
    %s199 = sphi 0, %s183
    %s205 = sphi 0, %s207
    %s208 = sphi 0, %s205
    %s209 = sphi 0, %s208
    %s225 = sphi 0, %s209
    %s231 = sphi 0, %s233
    %s234 = sphi 0, %s231
    %s235 = sphi 0, %s234
    %s251 = sphi 0, %s235
  $region4: #{lstm_encoder_forward.1} parent=0 // loop_header_branch
    %17 = sbr.rel (%p15) target = $region8
  $region5: #{lstm_encoder_forward.1} parent=0 // loop_body
    %s19 = ssub.s32 %s14, 1
    %s20 = ssub.s32 %s14, 2
    %s27 = sadd.s32 1, %s22
    %p28 = scmp.ge.s32.totalorder %s27, 1
    %s29 = scalar_select %p28, 0, %s27
    %s30 = sadd.s32 1, %s21
    %s31 = scalar_select %p28, %s30, %s21
    %p32 = scmp.ge.s32.totalorder %s31, 2
    %s33 = scalar_select %p32, 0, %s31
    %s34 = smul.u32 %s22, 2
    %s35 = ssub.s32 0, %s34
    %s36 = smul.u32 %s21, %s35
    %s37 = sadd.s32 %s22, %s36
    %s38 = smul.u32 %s29, 2
    %s39 = ssub.s32 0, %s38
    %s40 = smul.u32 %s33, %s39
    %s41 = sadd.s32 %s29, %s40
    %s42 = ssub.s32 %s37, %s41
    %p43 = scmp.eq.s32.totalorder %s42, 0
    %s45 = sadd.s32 %s44, 1
    %s46 = scalar_select %p43, %s44, %s45
    %p49 = pneg %p43
    %p50 = scmp.eq.s32.totalorder %s14, 1
    %p51 = por %p49, %p50
    %p52 = scmp.ne.s32.totalorder %s44, %s47
    %p53 = scmp.eq.s32.totalorder %s14, 0
    %p54 = por %p52, %p53
    %p55 = scmp.ne.s32.totalorder %s44, %s47
    %p56 = scmp.eq.s32.totalorder %s19, 1
    %p57 = por %p55, %p56
    %p58 = scmp.ne.s32.totalorder %s47, %s48
    %p59 = scmp.eq.s32.totalorder %s19, 0
    %p60 = por %p58, %p59
    %p61 = scmp.ne.s32.totalorder %s47, %s48
    %p62 = scmp.eq.s32.totalorder %s20, 1
    %p63 = por %p61, %p62
    %p65 = scmp.ne.s32.totalorder %s48, %s64
    %p66 = scmp.eq.s32.totalorder %s20, 0
    %p67 = por %p65, %p66
    %s69 = sadd.s32 %s68, 1
    %p72 = scmp.eq.s32.totalorder %s14, 1
    %p73 = scmp.ne.s32.totalorder %s68, %s70
    %p74 = scmp.eq.s32.totalorder %s14, 0
    %p75 = por %p73, %p74
    %p76 = scmp.ne.s32.totalorder %s68, %s70
    %p77 = scmp.eq.s32.totalorder %s19, 1
    %p78 = por %p76, %p77
    %p79 = scmp.ne.s32.totalorder %s70, %s71
    %p80 = scmp.eq.s32.totalorder %s19, 0
    %p81 = por %p79, %p80
    %p82 = scmp.ne.s32.totalorder %s70, %s71
    %p83 = scmp.eq.s32.totalorder %s20, 1
    %p84 = por %p82, %p83
    %p86 = scmp.ne.s32.totalorder %s71, %s85
    %p87 = scmp.eq.s32.totalorder %s20, 0
    %p88 = por %p86, %p87
    %s89 = ssub.s32 %s21, %s33
    %p90 = scmp.eq.s32.totalorder %s89, 0
    %s92 = sadd.s32 %s91, 1
    %s93 = scalar_select %p90, %s91, %s92
    %p96 = pneg %p90
    %p97 = scmp.eq.s32.totalorder %s14, 1
    %p98 = por %p96, %p97
    %p99 = scmp.ne.s32.totalorder %s91, %s94
    %p100 = scmp.eq.s32.totalorder %s14, 0
    %p101 = por %p99, %p100
    %p102 = scmp.ne.s32.totalorder %s91, %s94
    %p103 = scmp.eq.s32.totalorder %s19, 1
    %p104 = por %p102, %p103
    %p105 = scmp.ne.s32.totalorder %s94, %s95
    %p106 = scmp.eq.s32.totalorder %s19, 0
    %p107 = por %p105, %p106
    %p108 = scmp.ne.s32.totalorder %s94, %s95
    %p109 = scmp.eq.s32.totalorder %s20, 1
    %p110 = por %p108, %p109
    %p112 = scmp.ne.s32.totalorder %s95, %s111
    %p113 = scmp.eq.s32.totalorder %s20, 0
    %p114 = por %p112, %p113
    %s115 = ssub.s32 %s21, %s33
    %p116 = scmp.eq.s32.totalorder %s115, 0
    %s118 = sadd.s32 %s117, 1
    %s119 = scalar_select %p116, %s117, %s118
    %p122 = pneg %p116
    %p123 = scmp.eq.s32.totalorder %s14, 1
    %p124 = por %p122, %p123
    %p125 = scmp.ne.s32.totalorder %s117, %s120
    %p126 = scmp.eq.s32.totalorder %s14, 0
    %p127 = por %p125, %p126
    %p128 = scmp.ne.s32.totalorder %s117, %s120
    %p129 = scmp.eq.s32.totalorder %s19, 1
    %p130 = por %p128, %p129
    %p131 = scmp.ne.s32.totalorder %s120, %s121
    %p132 = scmp.eq.s32.totalorder %s19, 0
    %p133 = por %p131, %p132
    %p134 = scmp.ne.s32.totalorder %s120, %s121
    %p135 = scmp.eq.s32.totalorder %s20, 1
    %p136 = por %p134, %p135
    %p138 = scmp.ne.s32.totalorder %s121, %s137
    %p139 = scmp.eq.s32.totalorder %s20, 0
    %p140 = por %p138, %p139
    %s141 = ssub.s32 %s21, %s33
    %p142 = scmp.eq.s32.totalorder %s141, 0
    %s144 = sadd.s32 %s143, 1
    %s145 = scalar_select %p142, %s143, %s144
    %p148 = pneg %p142
    %p149 = scmp.eq.s32.totalorder %s14, 1
    %p150 = por %p148, %p149
    %p151 = scmp.ne.s32.totalorder %s143, %s146
    %p152 = scmp.eq.s32.totalorder %s14, 0
    %p153 = por %p151, %p152
    %p154 = scmp.ne.s32.totalorder %s143, %s146
    %p155 = scmp.eq.s32.totalorder %s19, 1
    %p156 = por %p154, %p155
    %p157 = scmp.ne.s32.totalorder %s146, %s147
    %p158 = scmp.eq.s32.totalorder %s19, 0
    %p159 = por %p157, %p158
    %p160 = scmp.ne.s32.totalorder %s146, %s147
    %p161 = scmp.eq.s32.totalorder %s20, 1
    %p162 = por %p160, %p161
    %p164 = scmp.ne.s32.totalorder %s147, %s163
    %p165 = scmp.eq.s32.totalorder %s20, 0
    %p166 = por %p164, %p165
    %s167 = smul.u32 %s22, 2
    %s168 = ssub.s32 0, %s167
    %s169 = smul.u32 %s21, %s168
    %s170 = sadd.s32 %s22, %s169
    %s171 = smul.u32 %s29, 2
    %s172 = ssub.s32 0, %s171
    %s173 = smul.u32 %s33, %s172
    %s174 = sadd.s32 %s29, %s173
    %s175 = ssub.s32 %s21, %s33
    %s176 = ssub.s32 %s170, %s174
    %s177 = sor.u32 %s175, %s176
    %p178 = scmp.eq.s32.totalorder %s177, 0
    %s180 = sadd.s32 %s179, 1
    %s181 = scalar_select %p178, %s179, %s180
    %p184 = pneg %p178
    %p185 = scmp.eq.s32.totalorder %s14, 1
    %p186 = por %p184, %p185
    %p187 = scmp.ne.s32.totalorder %s179, %s182
    %p188 = scmp.eq.s32.totalorder %s14, 0
    %p189 = por %p187, %p188
    %p190 = scmp.ne.s32.totalorder %s179, %s182
    %p191 = scmp.eq.s32.totalorder %s19, 1
    %p192 = por %p190, %p191
    %p193 = scmp.ne.s32.totalorder %s182, %s183
    %p194 = scmp.eq.s32.totalorder %s19, 0
    %p195 = por %p193, %p194
    %p196 = scmp.ne.s32.totalorder %s182, %s183
    %p197 = scmp.eq.s32.totalorder %s20, 1
    %p198 = por %p196, %p197
    %p200 = scmp.ne.s32.totalorder %s183, %s199
    %p201 = scmp.eq.s32.totalorder %s20, 0
    %p202 = por %p200, %p201
    %s203 = ssub.s32 %s21, %s33
    %p204 = scmp.eq.s32.totalorder %s203, 0
    %s206 = sadd.s32 %s205, 1
    %s207 = scalar_select %p204, %s205, %s206
    %p210 = pneg %p204
    %p211 = scmp.eq.s32.totalorder %s14, 1
    %p212 = por %p210, %p211
    %p213 = scmp.ne.s32.totalorder %s205, %s208
    %p214 = scmp.eq.s32.totalorder %s14, 0
    %p215 = por %p213, %p214
    %p216 = scmp.ne.s32.totalorder %s205, %s208
    %p217 = scmp.eq.s32.totalorder %s19, 1
    %p218 = por %p216, %p217
    %p219 = scmp.ne.s32.totalorder %s208, %s209
    %p220 = scmp.eq.s32.totalorder %s19, 0
    %p221 = por %p219, %p220
    %p222 = scmp.ne.s32.totalorder %s208, %s209
    %p223 = scmp.eq.s32.totalorder %s20, 1
    %p224 = por %p222, %p223
    %p226 = scmp.ne.s32.totalorder %s209, %s225
    %p227 = scmp.eq.s32.totalorder %s20, 0
    %p228 = por %p226, %p227
    %s229 = ssub.s32 %s21, %s33
    %p230 = scmp.eq.s32.totalorder %s229, 0
    %s232 = sadd.s32 %s231, 1
    %s233 = scalar_select %p230, %s231, %s232
    %p236 = pneg %p230
    %p237 = scmp.eq.s32.totalorder %s14, 1
    %p238 = por %p236, %p237
    %p239 = scmp.ne.s32.totalorder %s231, %s234
    %p240 = scmp.eq.s32.totalorder %s14, 0
    %p241 = por %p239, %p240
    %p242 = scmp.ne.s32.totalorder %s231, %s234
    %p243 = scmp.eq.s32.totalorder %s19, 1
    %p244 = por %p242, %p243
    %p245 = scmp.ne.s32.totalorder %s234, %s235
    %p246 = scmp.eq.s32.totalorder %s19, 0
    %p247 = por %p245, %p246
    %p248 = scmp.ne.s32.totalorder %s234, %s235
    %p249 = scmp.eq.s32.totalorder %s20, 1
    %p250 = por %p248, %p249
    %p252 = scmp.ne.s32.totalorder %s235, %s251
    %p253 = scmp.eq.s32.totalorder %s20, 0
    %p254 = por %p252, %p253
    %p255 = scmp.le.s32.totalorder 1, %s14
    %p256 = scmp.lt.s32.totalorder %s14, 3
    %p257 = pnand %p255, %p256
    %p258 = pneg %p257
    // Predicated region
    $region9: #{lstm_encoder_forward.1} parent=5 // pred_check
      _
    $region10: #{lstm_encoder_forward.1} parent=5 // pred_check_branch
      %260 = sbr.rel (%p257) target = $region12
    $region11: #{lstm_encoder_forward.1} parent=5 // pred_region
      %s261 = ssub.s32 %s14, 1
      // Predicated region
      $region13: #{lstm_encoder_forward.1} parent=11 // pred_check
        %p262 = pneg %p81
      $region14: #{lstm_encoder_forward.1} parent=11 // pred_check_branch
        %264 = sbr.rel (%p262) target = $region16
      $region15: #{lstm_encoder_forward.1} parent=11 // pred_region
        _
      $region16: #{lstm_encoder_forward.1} parent=11 // pred_fallthru
        _
    $region12: #{lstm_encoder_forward.1} parent=5 // pred_fallthru
      _
    %p265 = scmp.lt.s32.totalorder %s14, 2
    // Predicated region
    $region17: #{lstm_encoder_forward.1} parent=5 // pred_check
      %p266 = pneg %p265
    $region18: #{lstm_encoder_forward.1} parent=5 // pred_check_branch
      %268 = sbr.rel (%p266) target = $region20
    $region19: #{lstm_encoder_forward.1} parent=5 // pred_region
      // Predicated region
      $region21: #{lstm_encoder_forward.1} parent=19 // pred_check
        %p269 = pneg %p54
      $region22: #{lstm_encoder_forward.1} parent=19 // pred_check_branch
        %271 = sbr.rel (%p269) target = $region24
      $region23: #{lstm_encoder_forward.1} parent=19 // pred_region
        %s272 = smul.u32 %s22, 2
        %s273 = ssub.s32 0, %s272
        %s274 = smul.u32 %s21, %s273
        %s275 = sadd.s32 %s22, %s274
        %s276 = smul.u32 8, %s275
        %p277 = scmp.lt.s32.totalorder %s276, 7
        %s278 = scalar_select %p277, %s276, 7
        %s279 = smul.addr %s278, 4
        %s280 = scalar_lea.vmem %s0, %s279
        %s281 = smul.u32 %s22, 2
        %s282 = ssub.s32 0, %s281
        %s283 = smul.u32 %s21, %s282
        %s284 = sadd.s32 %s22, %s283
        %s285 = smul.u32 8, %s284
      $region24: #{lstm_encoder_forward.1} parent=19 // pred_fallthru
        _
      // Predicated region
      $region25: #{lstm_encoder_forward.1} parent=19 // pred_check
        %p286 = pneg %p101
      $region26: #{lstm_encoder_forward.1} parent=19 // pred_check_branch
        %288 = sbr.rel (%p286) target = $region28
      $region27: #{lstm_encoder_forward.1} parent=19 // pred_region
        %p289 = scmp.lt.s32.totalorder %s21, 1
        %s290 = scalar_select %p289, %s21, 1
        %s291 = smul.addr %s290, 2
        %s292 = smul.addr %s291, 4
        %s293 = scalar_lea.vmem %s2, %s292
      $region28: #{lstm_encoder_forward.1} parent=19 // pred_fallthru
        _
      // Predicated region
      $region29: #{lstm_encoder_forward.1} parent=19 // pred_check
        %p294 = pneg %p127
      $region30: #{lstm_encoder_forward.1} parent=19 // pred_check_branch
        %296 = sbr.rel (%p294) target = $region32
      $region31: #{lstm_encoder_forward.1} parent=19 // pred_region
        %p297 = scmp.lt.s32.totalorder %s21, 1
        %s298 = scalar_select %p297, %s21, 1
        %s299 = smul.addr %s298, 2
        %s300 = smul.addr %s299, 4
        %s301 = scalar_lea.vmem %s3, %s300
      $region32: #{lstm_encoder_forward.1} parent=19 // pred_fallthru
        _
      // Predicated region
      $region33: #{lstm_encoder_forward.1} parent=19 // pred_check
        %p302 = pneg %p153
      $region34: #{lstm_encoder_forward.1} parent=19 // pred_check_branch
        %304 = sbr.rel (%p302) target = $region36
      $region35: #{lstm_encoder_forward.1} parent=19 // pred_region
        %p305 = scmp.lt.s32.totalorder %s21, 1
        %s306 = scalar_select %p305, %s21, 1
        %s307 = scalar_lea.vmem %s4, %s306
      $region36: #{lstm_encoder_forward.1} parent=19 // pred_fallthru
        _
    $region20: #{lstm_encoder_forward.1} parent=5 // pred_fallthru
      _
    %p308 = scmp.le.s32.totalorder 1, %s14
    %p309 = scmp.lt.s32.totalorder %s14, 3
    %p310 = pnand %p308, %p309
    %p311 = pneg %p310
    // Predicated region
    $region37: #{lstm_encoder_forward.1} parent=5 // pred_check
      _
    $region38: #{lstm_encoder_forward.1} parent=5 // pred_check_branch
      %313 = sbr.rel (%p310) target = $region40
    $region39: #{lstm_encoder_forward.1} parent=5 // pred_region
      %s314 = ssub.s32 %s14, 1
      %s315 = smul.u32 %s24, 2
      %s316 = ssub.s32 0, %s315
      %s317 = smul.u32 %s23, %s316
      %s318 = sadd.s32 %s24, %s317
      %s319 = smul.u32 8, %s318
      %p320 = scmp.lt.s32.totalorder %s319, 7
      %s321 = scalar_select %p320, %s319, 7
      %s322 = smul.addr %s321, 4
      %s323 = scalar_lea.vmem %s0, %s322
      %p324 = pneg %p60
      %p325 = pneg %p57
      %p326 = pneg %p81
      %p327 = pneg %p78
      %p328 = scmp.lt.s32.totalorder %s23, 1
      %s329 = scalar_select %p328, %s23, 1
      %s330 = smul.addr %s329, 2
      %s331 = smul.addr %s330, 4
      %s332 = scalar_lea.vmem %s2, %s331
      %p333 = pneg %p107
      %p334 = pneg %p104
      %p335 = scmp.lt.s32.totalorder %s23, 1
      %s336 = scalar_select %p335, %s23, 1
      %s337 = smul.addr %s336, 2
      %s338 = smul.addr %s337, 4
      %s339 = scalar_lea.vmem %s3, %s338
      %p340 = pneg %p133
      %p341 = pneg %p130
      %p342 = scmp.lt.s32.totalorder %s23, 1
      %s343 = scalar_select %p342, %s23, 1
      %s344 = scalar_lea.vmem %s4, %s343
      %p345 = pneg %p159
      %p346 = pneg %p156
      %p347 = pneg %p195
      %p348 = pneg %p192
      %s349 = smul.u32 %s24, 2
      %s350 = ssub.s32 0, %s349
      %s351 = smul.u32 %s23, %s350
      %s352 = sadd.s32 %s24, %s351
      %s353 = smul.u32 8, %s352
      %p354 = scmp.lt.s32.totalorder %s23, 1
      %s355 = scalar_select %p354, %s23, 1
      %p356 = scmp.lt.s32.totalorder %s353, 7
      %s357 = scalar_select %p356, %s353, 7
      %s358 = smul.addr %s355, 8
      %s359 = sadd.s32 %s357, %s358
      %s360 = smul.addr %s359, 8
      %s361 = scalar_lea.vmem %s5, %s360
      %p362 = pneg %p221
      %p363 = pneg %p218
      %p364 = scmp.lt.s32.totalorder %s23, 1
      %s365 = scalar_select %p364, %s23, 1
      %s366 = smul.addr %s365, 8
      %s367 = scalar_lea.vmem %s6, %s366
      %p368 = pneg %p247
      %p369 = pneg %p244
      %p370 = scmp.lt.s32.totalorder %s23, 1
      %s371 = scalar_select %p370, %s23, 1
      %s372 = smul.addr %s371, 8
      %s373 = scalar_lea.vmem %s7, %s372
      %s374 = smul.u32 %s24, 2
      %s375 = ssub.s32 0, %s374
      %s376 = smul.u32 %s23, %s375
      %s377 = sadd.s32 %s24, %s376
      %s378 = smul.u32 8, %s377
      %p379 = scmp.lt.s32.totalorder %s378, 7
      %s380 = scalar_select %p379, %s378, 7
      %s381 = smul.addr %s380, 4
      %s382 = scalar_lea.vmem %s0, %s381
      %s383 = smul.u32 %s24, 2
      %s384 = ssub.s32 0, %s383
      %s385 = smul.u32 %s23, %s384
      %s386 = sadd.s32 %s24, %s385
      %s387 = smul.u32 8, %s386
      %p388 = scmp.lt.s32.totalorder %s23, 1
      %s389 = scalar_select %p388, %s23, 1
      %s390 = smul.addr %s389, 2
      %s391 = smul.addr %s390, 4
      %s392 = scalar_lea.vmem %s2, %s391
      %p393 = scmp.lt.s32.totalorder %s23, 1
      %s394 = scalar_select %p393, %s23, 1
      %s395 = smul.addr %s394, 2
      %s396 = smul.addr %s395, 4
      %s397 = scalar_lea.vmem %s3, %s396
      %p398 = scmp.lt.s32.totalorder %s23, 1
      %s399 = scalar_select %p398, %s23, 1
      %s400 = scalar_lea.vmem %s4, %s399
      %s401 = smul.u32 %s24, 2
      %s402 = ssub.s32 0, %s401
      %s403 = smul.u32 %s23, %s402
      %s404 = sadd.s32 %s24, %s403
      %s405 = smul.u32 8, %s404
      %p406 = scmp.lt.s32.totalorder %s23, 1
      %s407 = scalar_select %p406, %s23, 1
      %p408 = scmp.lt.s32.totalorder %s405, 7
      %s409 = scalar_select %p408, %s405, 7
      %s410 = smul.addr %s407, 8
      %s411 = sadd.s32 %s409, %s410
      %s412 = smul.addr %s411, 8
      %s413 = scalar_lea.vmem %s5, %s412
      %s414 = smul.u32 %s24, 2
      %s415 = ssub.s32 0, %s414
      %s416 = smul.u32 %s23, %s415
      %s417 = sadd.s32 %s24, %s416
      %s418 = smul.u32 8, %s417
      %p419 = scmp.lt.s32.totalorder %s23, 1
      %s420 = scalar_select %p419, %s23, 1
      %s421 = smul.addr %s420, 8
      %s422 = scalar_lea.vmem %s6, %s421
      %p423 = scmp.lt.s32.totalorder %s23, 1
      %s424 = scalar_select %p423, %s23, 1
      %s425 = smul.addr %s424, 8
      %s426 = scalar_lea.vmem %s7, %s425
      %s428 = smul.u32 %s24, 2
      %s429 = ssub.s32 0, %s428
      %s430 = smul.u32 %s23, %s429
      %s431 = sadd.s32 %s24, %s430
      %p432 = scmp.eq.s32.totalorder %s24, 0
      // Predicated region
      $region41: #{lstm_encoder_forward.1} parent=39 // pred_check
        %p433 = pneg %p432
      $region42: #{lstm_encoder_forward.1} parent=39 // pred_check_branch
        %435 = sbr.rel (%p433) target = $region44
      $region43: #{lstm_encoder_forward.1} parent=39 // pred_region
        %vm436 = vcmask 130048
        %437 = vst.msk [vmem:[#allocation3] sm:$0xff] %vm436, 0.0
        %438 = vst.msk [vmem:[#allocation4] sm:$0xff] %vm436, 0.0
      $region44: #{lstm_encoder_forward.1} parent=39 // pred_fallthru
        _
      %v439 = vld [vmem:[%s382] sm:$0xf]
      %v440 = vld [vmem:[%s382 + $0x4] sm:$0xf]
      %v441 = vld [vmem:[%s382 + $0x8] sm:$0xf]
      %v442 = vld [vmem:[%s382 + $0xc] sm:$0xf]
      %v443 = vld [vmem:[%s382 + $0x10] sm:$0xf]
      %v444 = vld [vmem:[%s382 + $0x14] sm:$0xf]
      %v445 = vld [vmem:[%s382 + $0x18] sm:$0xf]
      %v446 = vld [vmem:[%s382 + $0x1c] sm:$0xf]
      %v447 = vld [vmem:[%s392] sm:$0xf]
      %v448 = vld [vmem:[%s392 + $0x4] sm:$0xf]
      %v457 = vunpack.c.l.b16 %v439
      %v458 = vunpack.c.l.b16 %v440
      %v459 = vunpack.c.l.b16 %v441
      %v460 = vunpack.c.l.b16 %v442
      %v461 = vunpack.c.l.b16 %v443
      %v462 = vunpack.c.l.b16 %v444
      %v463 = vunpack.c.l.b16 %v445
      %v464 = vunpack.c.l.b16 %v446
      %v465 = vpack.c.b16 %v458, %v457
      %v466 = vpack.c.b16 %v460, %v459
      %v467 = vpack.c.b16 %v462, %v461
      %v468 = vpack.c.b16 %v464, %v463
      %v471 = vunpack.c.l.b16 %v447
      %v472 = vunpack.c.l.b16 %v448
      %v473 = vpack.c.b16 %v472, %v471
      %vm475 = vcmask 130048
      %v477 = vsel %vm475, %v465, 0
      %v480 = vsel %vm475, %v466, 0
      %v483 = vsel %vm475, %v467, 0
      %v486 = vsel %vm475, %v468, 0
      %488 = vmatprep.subr.bf16.mxu0 0
      %489 = vmatpush1.bf16.msra.mxu0 0
      %490 = vmatprep.subr.bf16.mxu0 0
      %491 = vmatpush1.bf16.msra.mxu0 0
      %492 = vmatprep.subr.bf16.mxu0 0
      %493 = vmatpush1.bf16.msra.mxu0 0
      %494 = vmatprep.subr.bf16.mxu0 0
      %495 = vmatpush1.bf16.msra.mxu0 0
      %496 = vmatprep.subr.bf16.mxu0 0
      %497 = vmatpush1.bf16.msra.mxu0 0
      %498 = vmatprep.subr.bf16.mxu0 0
      %499 = vmatpush1.bf16.msra.mxu0 0
      %500 = vmatprep.subr.bf16.mxu0 0
      %501 = vmatpush1.bf16.msra.mxu0 0
      %502 = vmatprep.subr.bf16.mxu0 0
      %503 = vmatpush1.bf16.msra.mxu0 %v473
      %504 = vmatprep.subr.bf16.mxu0 0
      %505 = vmatpush2.bf16.msra.mxu0 0
      %506 = vmatprep.subr.bf16.mxu0 0
      %507 = vmatpush2.bf16.msra.mxu0 0
      %508 = vmatprep.subr.bf16.mxu0 0
      %509 = vmatpush2.bf16.msra.mxu0 0
      %510 = vmatprep.subr.bf16.mxu0 0
      %511 = vmatpush2.bf16.msra.mxu0 0
      %512 = vmatprep.subr.bf16.mxu0 0
      %513 = vmatpush2.bf16.msra.mxu0 0
      %514 = vmatprep.subr.bf16.mxu0 0
      %515 = vmatpush2.bf16.msra.mxu0 0
      %516 = vmatprep.subr.bf16.mxu0 0
      %517 = vmatpush2.bf16.msra.mxu0 0
      %518 = vmatprep.subr.bf16.mxu0 0
      %519 = vmatpush2.bf16.msra.mxu0 0
      %520 = vmatprep.mubr.bf16.mxu0 0
      %521 = vmatmul.mubr.bf16.gmra.mxu0 %v477
      %v522 = vpop.f32.mrf.mxu0
      %v523 = vadd.f32 0.0, %v522
      %v524 = vpop.f32.mrf.mxu0
      %v525 = vpop.f32.mrf.mxu0
      %v526 = vadd.f32 0.0, %v525
      %v527 = vpop.f32.mrf.mxu0
      %528 = vmatprep.mubr.bf16.mxu0 0
      %529 = vmatmul.mubr.bf16.gmra.mxu0 %v480
      %v530 = vpop.f32.mrf.mxu0
      %v531 = vadd.f32 0.0, %v530
      %v532 = vpop.f32.mrf.mxu0
      %v533 = vpop.f32.mrf.mxu0
      %v534 = vadd.f32 0.0, %v533
      %v535 = vpop.f32.mrf.mxu0
      %536 = vmatprep.mubr.bf16.mxu0 0
      %537 = vmatmul.mubr.bf16.gmra.mxu0 %v483
      %v538 = vpop.f32.mrf.mxu0
      %v539 = vadd.f32 0.0, %v538
      %v540 = vpop.f32.mrf.mxu0
      %v541 = vpop.f32.mrf.mxu0
      %v542 = vadd.f32 0.0, %v541
      %v543 = vpop.f32.mrf.mxu0
      %544 = vmatprep.mubr.bf16.mxu0 0
      %545 = vmatmul.mubr.bf16.gmra.mxu0 %v486
      %v546 = vpop.f32.mrf.mxu0
      %v547 = vadd.f32 0.0, %v546
      %v548 = vpop.f32.mrf.mxu0
      %v549 = vpop.f32.mrf.mxu0
      %v550 = vadd.f32 0.0, %v549
      %v551 = vpop.f32.mrf.mxu0
      %552 = vdwg.mxu0
      %v553 = vld [vmem:[%s400] sm:$0x1]
      %v555 = vlaneseq
      %v556 = vshrl.u32 %v555, 7
      %v557 = vsub.s32 0, %v556
      %v558 = vrot.slane %v553, %v557
      %v560 = vadd.f32 %v523, %v558
      %v561 = vadd.f32 %v526, %v558
      %v562 = vadd.f32 %v531, %v558
      %v563 = vadd.f32 %v534, %v558
      %v564 = vadd.f32 %v539, %v558
      %v565 = vadd.f32 %v542, %v558
      %v566 = vadd.f32 %v547, %v558
      %v567 = vadd.f32 %v550, %v558
      %vm568 = vcmask 523264
      %569 = vst.msk [vmem:[#allocation2] sm:$0xff] %vm568, %v560
      %570 = vst.msk [vmem:[#allocation2 + $0x8] sm:$0xff] %vm568, %v561
      %571 = vst.msk [vmem:[#allocation2 + $0x10] sm:$0xff] %vm568, %v562
      %572 = vst.msk [vmem:[#allocation2 + $0x18] sm:$0xff] %vm568, %v563
      %573 = vst.msk [vmem:[#allocation2 + $0x20] sm:$0xff] %vm568, %v564
      %574 = vst.msk [vmem:[#allocation2 + $0x28] sm:$0xff] %vm568, %v565
      %575 = vst.msk [vmem:[#allocation2 + $0x30] sm:$0xff] %vm568, %v566
      %576 = vst.msk [vmem:[#allocation2 + $0x38] sm:$0xff] %vm568, %v567
      %v577 = vld [vmem:[%s397] sm:$0xf]
      %v578 = vld [vmem:[%s397 + $0x4] sm:$0xf]
      %v579 = vld [vmem:[%s1] sm:$0xff]
      %s580 = smul.u32 %s23, 7
      %s581 = smul.u32 %s23, 2
      %s582 = ssub.s32 1, %s581
      %s583 = smul.u32 %s431, 8
      %v584 = vld [vmem:[#allocation3] sm:$0xff]
      %v585 = vld [vmem:[#allocation4] sm:$0xff]
      %s586 = smul.u32 %s580, 8
      %s587 = scalar_lea.vmem [#allocation2], %s586
      %v588 = vld [vmem:[%s587] sm:$0xff]
      %v589 = vpack.c.bf16 %v584, %v584
      %v592 = vunpack.c.l.b16 %v577
      %v593 = vunpack.c.l.b16 %v578
      %v594 = vpack.c.b16 %v593, %v592
      %v597 = vsel %vm475, %v589, 0
      %599 = vmatprep.subr.bf16.mxu0 0
      %600 = vmatpush1.bf16.msra.mxu0 0
      %601 = vmatprep.subr.bf16.mxu0 0
      %602 = vmatpush1.bf16.msra.mxu0 0
      %603 = vmatprep.subr.bf16.mxu0 0
      %604 = vmatpush1.bf16.msra.mxu0 0
      %605 = vmatprep.subr.bf16.mxu0 0
      %606 = vmatpush1.bf16.msra.mxu0 0
      %607 = vmatprep.subr.bf16.mxu0 0
      %608 = vmatpush1.bf16.msra.mxu0 0
      %609 = vmatprep.subr.bf16.mxu0 0
      %610 = vmatpush1.bf16.msra.mxu0 0
      %611 = vmatprep.subr.bf16.mxu0 0
      %612 = vmatpush1.bf16.msra.mxu0 0
      %613 = vmatprep.subr.bf16.mxu0 0
      %614 = vmatpush1.bf16.msra.mxu0 %v594
      %615 = vmatprep.subr.bf16.mxu0 0
      %616 = vmatpush2.bf16.msra.mxu0 0
      %617 = vmatprep.subr.bf16.mxu0 0
      %618 = vmatpush2.bf16.msra.mxu0 0
      %619 = vmatprep.subr.bf16.mxu0 0
      %620 = vmatpush2.bf16.msra.mxu0 0
      %621 = vmatprep.subr.bf16.mxu0 0
      %622 = vmatpush2.bf16.msra.mxu0 0
      %623 = vmatprep.subr.bf16.mxu0 0
      %624 = vmatpush2.bf16.msra.mxu0 0
      %625 = vmatprep.subr.bf16.mxu0 0
      %626 = vmatpush2.bf16.msra.mxu0 0
      %627 = vmatprep.subr.bf16.mxu0 0
      %628 = vmatpush2.bf16.msra.mxu0 0
      %629 = vmatprep.subr.bf16.mxu0 0
      %630 = vmatpush2.bf16.msra.mxu0 0
      %631 = vmatprep.mubr.bf16.mxu0 0
      %632 = vmatmul.mubr.bf16.gmra.mxu0 %v597
      %v633 = vpop.f32.mrf.mxu0
      %v634 = vadd.f32 0.0, %v633
      %v635 = vpop.f32.mrf.mxu0
      %v636 = vpop.f32.mrf.mxu0
      %v637 = vpop.f32.mrf.mxu0
      %638 = vdwg.mxu0
      %v639 = vadd.f32 %v588, %v634
      %v640 = vxor.u32 %v639, 2147483648
      %v641 = vmul.f32 %v640, 1.442695
      %v642 = vpow.pop %v641
      %v643 = vadd.f32 %v642, 1.0
      %v644 = vrcp.pop %v643
      %v645 = vmul.f32 1.0, %v644
      %v646 = vtanh.pop %v639
      %648 = vrot.lane.b32.xlu0 %v585, 16
      %v649 = vpop.permute.xlu0 %648
      %v651 = vmul.f32 %v645, %v649
      %653 = vrot.lane.b32.xlu0 %v646, 96
      %v654 = vpop.permute.xlu0 %653
      %v656 = vmul.f32 %v645, %v654
      %658 = vrot.lane.b32.xlu0 %v656, 16
      %v659 = vpop.permute.xlu0 %658
      %v661 = vadd.f32 %v651, %v659
      %v662 = vtanh.pop %v661
      %664 = vrot.lane.b32.xlu0 %v662, 32
      %v665 = vpop.permute.xlu0 %664
      %v667 = vmul.f32 %v645, %v665
      %s668 = sadd.s32 %s583, %s580
      %v669 = vstv %s668
      %vm670 = vcmp.lt.s32.totalorder %v669, %v579
      %v671 = vsel %vm670, 1, 0
      %672 = vset.pattern.permute.xlu0 0
      %673 = vperm.xlu0 %672, %v671
      %v674 = vpop.permute.xlu0 %673
      %vm675 = vcmp.eq.s32.totalorder %v674, 1
      %677 = vrot.lane.b32.xlu0 %v584, 48
      %v678 = vpop.permute.xlu0 %677
      %v680 = vsel %vm675, %v667, %v678
      %v681 = vsel %vm675, %v661, %v649
      %v682 = vsel %vm675, %v667, 0.0
      %684 = vrot.lane.b32.xlu0 %v682, 80
      %v685 = vpop.permute.xlu0 %684
      %s687 = scalar_lea.vmem %s413, %s586
      %688 = vst.msk [vmem:[%s687] sm:$0xff] %vm475, %v685
      %s689 = sadd.s32 %s580, %s582
      %s690 = smul.u32 %s689, 8
      %s691 = scalar_lea.vmem [#allocation2], %s690
      %v692 = vld [vmem:[%s691] sm:$0xff]
      %v693 = vpack.c.bf16 %v680, %v680
      %695 = vrot.lane.b32.xlu0 %v693, 80
      %v696 = vpop.permute.xlu0 %695
      %v698 = vsel %vm475, %v696, 0
      %700 = vmatprep.subr.bf16.mxu0 0
      %701 = vmatpush1.bf16.msra.mxu0 0
      %702 = vmatprep.subr.bf16.mxu0 0
      %703 = vmatpush1.bf16.msra.mxu0 0
      %704 = vmatprep.subr.bf16.mxu0 0
      %705 = vmatpush1.bf16.msra.mxu0 0
      %706 = vmatprep.subr.bf16.mxu0 0
      %707 = vmatpush1.bf16.msra.mxu0 0
      %708 = vmatprep.subr.bf16.mxu0 0
      %709 = vmatpush1.bf16.msra.mxu0 0
      %710 = vmatprep.subr.bf16.mxu0 0
      %711 = vmatpush1.bf16.msra.mxu0 0
      %712 = vmatprep.subr.bf16.mxu0 0
      %713 = vmatpush1.bf16.msra.mxu0 0
      %714 = vmatprep.subr.bf16.mxu0 0
      %715 = vmatpush1.bf16.msra.mxu0 %v594
      %716 = vmatprep.subr.bf16.mxu0 0
      %717 = vmatpush2.bf16.msra.mxu0 0
      %718 = vmatprep.subr.bf16.mxu0 0
      %719 = vmatpush2.bf16.msra.mxu0 0
      %720 = vmatprep.subr.bf16.mxu0 0
      %721 = vmatpush2.bf16.msra.mxu0 0
      %722 = vmatprep.subr.bf16.mxu0 0
      %723 = vmatpush2.bf16.msra.mxu0 0
      %724 = vmatprep.subr.bf16.mxu0 0
      %725 = vmatpush2.bf16.msra.mxu0 0
      %726 = vmatprep.subr.bf16.mxu0 0
      %727 = vmatpush2.bf16.msra.mxu0 0
      %728 = vmatprep.subr.bf16.mxu0 0
      %729 = vmatpush2.bf16.msra.mxu0 0
      %730 = vmatprep.subr.bf16.mxu0 0
      %731 = vmatpush2.bf16.msra.mxu0 0
      %732 = vmatprep.mubr.bf16.mxu0 0
      %733 = vmatmul.mubr.bf16.gmra.mxu0 %v698
      %v734 = vpop.f32.mrf.mxu0
      %v735 = vadd.f32 0.0, %v734
      %v736 = vpop.f32.mrf.mxu0
      %v737 = vpop.f32.mrf.mxu0
      %v738 = vpop.f32.mrf.mxu0
      %739 = vdwg.mxu0
      %v740 = vadd.f32 %v692, %v735
      %v741 = vxor.u32 %v740, 2147483648
      %v742 = vmul.f32 %v741, 1.442695
      %v743 = vpow.pop %v742
      %v744 = vadd.f32 %v743, 1.0
      %v745 = vrcp.pop %v744
      %v746 = vmul.f32 1.0, %v745
      %v747 = vtanh.pop %v740
      %v748 = vmul.f32 %v746, %v681
      %750 = vrot.lane.b32.xlu0 %v747, 96
      %v751 = vpop.permute.xlu0 %750
      %v753 = vmul.f32 %v746, %v751
      %755 = vrot.lane.b32.xlu0 %v753, 16
      %v756 = vpop.permute.xlu0 %755
      %v758 = vadd.f32 %v748, %v756
      %v759 = vtanh.pop %v758
      %761 = vrot.lane.b32.xlu0 %v759, 32
      %v762 = vpop.permute.xlu0 %761
      %v764 = vmul.f32 %v746, %v762
      %s765 = sadd.s32 %s583, %s689
      %v766 = vstv %s765
      %vm767 = vcmp.lt.s32.totalorder %v766, %v579
      %v768 = vsel %vm767, 1, 0
      %769 = vset.pattern.permute.xlu0 0
      %770 = vperm.xlu0 %769, %v768
      %v771 = vpop.permute.xlu0 %770
      %vm772 = vcmp.eq.s32.totalorder %v771, 1
      %v773 = vsel %vm772, %v764, %v680
      %v774 = vsel %vm772, %v758, %v681
      %v775 = vsel %vm772, %v764, 0.0
      %777 = vrot.lane.b32.xlu0 %v775, 80
      %v778 = vpop.permute.xlu0 %777
      %s780 = scalar_lea.vmem %s413, %s690
      %781 = vst.msk [vmem:[%s780] sm:$0xff] %vm475, %v778
      %s782 = smul.u32 %s582, 2
      %s783 = sadd.s32 %s580, %s782
      %s784 = smul.u32 %s783, 8
      %s785 = scalar_lea.vmem [#allocation2], %s784
      %v786 = vld [vmem:[%s785] sm:$0xff]
      %v787 = vpack.c.bf16 %v773, %v773
      %789 = vrot.lane.b32.xlu0 %v787, 80
      %v790 = vpop.permute.xlu0 %789
      %v792 = vsel %vm475, %v790, 0
      %794 = vmatprep.subr.bf16.mxu0 0
      %795 = vmatpush1.bf16.msra.mxu0 0
      %796 = vmatprep.subr.bf16.mxu0 0
      %797 = vmatpush1.bf16.msra.mxu0 0
      %798 = vmatprep.subr.bf16.mxu0 0
      %799 = vmatpush1.bf16.msra.mxu0 0
      %800 = vmatprep.subr.bf16.mxu0 0
      %801 = vmatpush1.bf16.msra.mxu0 0
      %802 = vmatprep.subr.bf16.mxu0 0
      %803 = vmatpush1.bf16.msra.mxu0 0
      %804 = vmatprep.subr.bf16.mxu0 0
      %805 = vmatpush1.bf16.msra.mxu0 0
      %806 = vmatprep.subr.bf16.mxu0 0
      %807 = vmatpush1.bf16.msra.mxu0 0
      %808 = vmatprep.subr.bf16.mxu0 0
      %809 = vmatpush1.bf16.msra.mxu0 %v594
      %810 = vmatprep.subr.bf16.mxu0 0
      %811 = vmatpush2.bf16.msra.mxu0 0
      %812 = vmatprep.subr.bf16.mxu0 0
      %813 = vmatpush2.bf16.msra.mxu0 0
      %814 = vmatprep.subr.bf16.mxu0 0
      %815 = vmatpush2.bf16.msra.mxu0 0
      %816 = vmatprep.subr.bf16.mxu0 0
      %817 = vmatpush2.bf16.msra.mxu0 0
      %818 = vmatprep.subr.bf16.mxu0 0
      %819 = vmatpush2.bf16.msra.mxu0 0
      %820 = vmatprep.subr.bf16.mxu0 0
      %821 = vmatpush2.bf16.msra.mxu0 0
      %822 = vmatprep.subr.bf16.mxu0 0
      %823 = vmatpush2.bf16.msra.mxu0 0
      %824 = vmatprep.subr.bf16.mxu0 0
      %825 = vmatpush2.bf16.msra.mxu0 0
      %826 = vmatprep.mubr.bf16.mxu0 0
      %827 = vmatmul.mubr.bf16.gmra.mxu0 %v792
      %v828 = vpop.f32.mrf.mxu0
      %v829 = vadd.f32 0.0, %v828
      %v830 = vpop.f32.mrf.mxu0
      %v831 = vpop.f32.mrf.mxu0
      %v832 = vpop.f32.mrf.mxu0
      %833 = vdwg.mxu0
      %v834 = vadd.f32 %v786, %v829
      %v835 = vxor.u32 %v834, 2147483648
      %v836 = vmul.f32 %v835, 1.442695
      %v837 = vpow.pop %v836
      %v838 = vadd.f32 %v837, 1.0
      %v839 = vrcp.pop %v838
      %v840 = vmul.f32 1.0, %v839
      %v841 = vtanh.pop %v834
      %v842 = vmul.f32 %v840, %v774
      %844 = vrot.lane.b32.xlu0 %v841, 96
      %v845 = vpop.permute.xlu0 %844
      %v847 = vmul.f32 %v840, %v845
      %849 = vrot.lane.b32.xlu0 %v847, 16
      %v850 = vpop.permute.xlu0 %849
      %v852 = vadd.f32 %v842, %v850
      %v853 = vtanh.pop %v852
      %855 = vrot.lane.b32.xlu0 %v853, 32
      %v856 = vpop.permute.xlu0 %855
      %v858 = vmul.f32 %v840, %v856
      %s859 = sadd.s32 %s583, %s783
      %v860 = vstv %s859
      %vm861 = vcmp.lt.s32.totalorder %v860, %v579
      %v862 = vsel %vm861, 1, 0
      %863 = vset.pattern.permute.xlu0 0
      %864 = vperm.xlu0 %863, %v862
      %v865 = vpop.permute.xlu0 %864
      %vm866 = vcmp.eq.s32.totalorder %v865, 1
      %v867 = vsel %vm866, %v858, %v773
      %v868 = vsel %vm866, %v852, %v774
      %v869 = vsel %vm866, %v858, 0.0
      %871 = vrot.lane.b32.xlu0 %v869, 80
      %v872 = vpop.permute.xlu0 %871
      %s874 = scalar_lea.vmem %s413, %s784
      %875 = vst.msk [vmem:[%s874] sm:$0xff] %vm475, %v872
      %s876 = smul.u32 %s582, 3
      %s877 = sadd.s32 %s580, %s876
      %s878 = smul.u32 %s877, 8
      %s879 = scalar_lea.vmem [#allocation2], %s878
      %v880 = vld [vmem:[%s879] sm:$0xff]
      %v881 = vpack.c.bf16 %v867, %v867
      %883 = vrot.lane.b32.xlu0 %v881, 80
      %v884 = vpop.permute.xlu0 %883
      %v886 = vsel %vm475, %v884, 0
      %888 = vmatprep.subr.bf16.mxu0 0
      %889 = vmatpush1.bf16.msra.mxu0 0
      %890 = vmatprep.subr.bf16.mxu0 0
      %891 = vmatpush1.bf16.msra.mxu0 0
      %892 = vmatprep.subr.bf16.mxu0 0
      %893 = vmatpush1.bf16.msra.mxu0 0
      %894 = vmatprep.subr.bf16.mxu0 0
      %895 = vmatpush1.bf16.msra.mxu0 0
      %896 = vmatprep.subr.bf16.mxu0 0
      %897 = vmatpush1.bf16.msra.mxu0 0
      %898 = vmatprep.subr.bf16.mxu0 0
      %899 = vmatpush1.bf16.msra.mxu0 0
      %900 = vmatprep.subr.bf16.mxu0 0
      %901 = vmatpush1.bf16.msra.mxu0 0
      %902 = vmatprep.subr.bf16.mxu0 0
      %903 = vmatpush1.bf16.msra.mxu0 %v594
      %904 = vmatprep.subr.bf16.mxu0 0
      %905 = vmatpush2.bf16.msra.mxu0 0
      %906 = vmatprep.subr.bf16.mxu0 0
      %907 = vmatpush2.bf16.msra.mxu0 0
      %908 = vmatprep.subr.bf16.mxu0 0
      %909 = vmatpush2.bf16.msra.mxu0 0
      %910 = vmatprep.subr.bf16.mxu0 0
      %911 = vmatpush2.bf16.msra.mxu0 0
      %912 = vmatprep.subr.bf16.mxu0 0
      %913 = vmatpush2.bf16.msra.mxu0 0
      %914 = vmatprep.subr.bf16.mxu0 0
      %915 = vmatpush2.bf16.msra.mxu0 0
      %916 = vmatprep.subr.bf16.mxu0 0
      %917 = vmatpush2.bf16.msra.mxu0 0
      %918 = vmatprep.subr.bf16.mxu0 0
      %919 = vmatpush2.bf16.msra.mxu0 0
      %920 = vmatprep.mubr.bf16.mxu0 0
      %921 = vmatmul.mubr.bf16.gmra.mxu0 %v886
      %v922 = vpop.f32.mrf.mxu0
      %v923 = vadd.f32 0.0, %v922
      %v924 = vpop.f32.mrf.mxu0
      %v925 = vpop.f32.mrf.mxu0
      %v926 = vpop.f32.mrf.mxu0
      %927 = vdwg.mxu0
      %v928 = vadd.f32 %v880, %v923
      %v929 = vxor.u32 %v928, 2147483648
      %v930 = vmul.f32 %v929, 1.442695
      %v931 = vpow.pop %v930
      %v932 = vadd.f32 %v931, 1.0
      %v933 = vrcp.pop %v932
      %v934 = vmul.f32 1.0, %v933
      %v935 = vtanh.pop %v928
      %v936 = vmul.f32 %v934, %v868
      %938 = vrot.lane.b32.xlu0 %v935, 96
      %v939 = vpop.permute.xlu0 %938
      %v941 = vmul.f32 %v934, %v939
      %943 = vrot.lane.b32.xlu0 %v941, 16
      %v944 = vpop.permute.xlu0 %943
      %v946 = vadd.f32 %v936, %v944
      %v947 = vtanh.pop %v946
      %949 = vrot.lane.b32.xlu0 %v947, 32
      %v950 = vpop.permute.xlu0 %949
      %v952 = vmul.f32 %v934, %v950
      %s953 = sadd.s32 %s583, %s877
      %v954 = vstv %s953
      %vm955 = vcmp.lt.s32.totalorder %v954, %v579
      %v956 = vsel %vm955, 1, 0
      %957 = vset.pattern.permute.xlu0 0
      %958 = vperm.xlu0 %957, %v956
      %v959 = vpop.permute.xlu0 %958
      %vm960 = vcmp.eq.s32.totalorder %v959, 1
      %v961 = vsel %vm960, %v952, %v867
      %v962 = vsel %vm960, %v946, %v868
      %v963 = vsel %vm960, %v952, 0.0
      %965 = vrot.lane.b32.xlu0 %v963, 80
      %v966 = vpop.permute.xlu0 %965
      %s968 = scalar_lea.vmem %s413, %s878
      %969 = vst.msk [vmem:[%s968] sm:$0xff] %vm475, %v966
      %s970 = smul.u32 %s582, 4
      %s971 = sadd.s32 %s580, %s970
      %s972 = smul.u32 %s971, 8
      %s973 = scalar_lea.vmem [#allocation2], %s972
      %v974 = vld [vmem:[%s973] sm:$0xff]
      %v975 = vpack.c.bf16 %v961, %v961
      %977 = vrot.lane.b32.xlu0 %v975, 80
      %v978 = vpop.permute.xlu0 %977
      %v980 = vsel %vm475, %v978, 0
      %982 = vmatprep.subr.bf16.mxu0 0
      %983 = vmatpush1.bf16.msra.mxu0 0
      %984 = vmatprep.subr.bf16.mxu0 0
      %985 = vmatpush1.bf16.msra.mxu0 0
      %986 = vmatprep.subr.bf16.mxu0 0
      %987 = vmatpush1.bf16.msra.mxu0 0
      %988 = vmatprep.subr.bf16.mxu0 0
      %989 = vmatpush1.bf16.msra.mxu0 0
      %990 = vmatprep.subr.bf16.mxu0 0
      %991 = vmatpush1.bf16.msra.mxu0 0
      %992 = vmatprep.subr.bf16.mxu0 0
      %993 = vmatpush1.bf16.msra.mxu0 0
      %994 = vmatprep.subr.bf16.mxu0 0
      %995 = vmatpush1.bf16.msra.mxu0 0
      %996 = vmatprep.subr.bf16.mxu0 0
      %997 = vmatpush1.bf16.msra.mxu0 %v594
      %998 = vmatprep.subr.bf16.mxu0 0
      %999 = vmatpush2.bf16.msra.mxu0 0
      %1000 = vmatprep.subr.bf16.mxu0 0
      %1001 = vmatpush2.bf16.msra.mxu0 0
      %1002 = vmatprep.subr.bf16.mxu0 0
      %1003 = vmatpush2.bf16.msra.mxu0 0
      %1004 = vmatprep.subr.bf16.mxu0 0
      %1005 = vmatpush2.bf16.msra.mxu0 0
      %1006 = vmatprep.subr.bf16.mxu0 0
      %1007 = vmatpush2.bf16.msra.mxu0 0
      %1008 = vmatprep.subr.bf16.mxu0 0
      %1009 = vmatpush2.bf16.msra.mxu0 0
      %1010 = vmatprep.subr.bf16.mxu0 0
      %1011 = vmatpush2.bf16.msra.mxu0 0
      %1012 = vmatprep.subr.bf16.mxu0 0
      %1013 = vmatpush2.bf16.msra.mxu0 0
      %1014 = vmatprep.mubr.bf16.mxu0 0
      %1015 = vmatmul.mubr.bf16.gmra.mxu0 %v980
      %v1016 = vpop.f32.mrf.mxu0
      %v1017 = vadd.f32 0.0, %v1016
      %v1018 = vpop.f32.mrf.mxu0
      %v1019 = vpop.f32.mrf.mxu0
      %v1020 = vpop.f32.mrf.mxu0
      %1021 = vdwg.mxu0
      %v1022 = vadd.f32 %v974, %v1017
      %v1023 = vxor.u32 %v1022, 2147483648
      %v1024 = vmul.f32 %v1023, 1.442695
      %v1025 = vpow.pop %v1024
      %v1026 = vadd.f32 %v1025, 1.0
      %v1027 = vrcp.pop %v1026
      %v1028 = vmul.f32 1.0, %v1027
      %v1029 = vtanh.pop %v1022
      %v1030 = vmul.f32 %v1028, %v962
      %1032 = vrot.lane.b32.xlu0 %v1029, 96
      %v1033 = vpop.permute.xlu0 %1032
      %v1035 = vmul.f32 %v1028, %v1033
      %1037 = vrot.lane.b32.xlu0 %v1035, 16
      %v1038 = vpop.permute.xlu0 %1037
      %v1040 = vadd.f32 %v1030, %v1038
      %v1041 = vtanh.pop %v1040
      %1043 = vrot.lane.b32.xlu0 %v1041, 32
      %v1044 = vpop.permute.xlu0 %1043
      %v1046 = vmul.f32 %v1028, %v1044
      %s1047 = sadd.s32 %s583, %s971
      %v1048 = vstv %s1047
      %vm1049 = vcmp.lt.s32.totalorder %v1048, %v579
      %v1050 = vsel %vm1049, 1, 0
      %1051 = vset.pattern.permute.xlu0 0
      %1052 = vperm.xlu0 %1051, %v1050
      %v1053 = vpop.permute.xlu0 %1052
      %vm1054 = vcmp.eq.s32.totalorder %v1053, 1
      %v1055 = vsel %vm1054, %v1046, %v961
      %v1056 = vsel %vm1054, %v1040, %v962
      %v1057 = vsel %vm1054, %v1046, 0.0
      %1059 = vrot.lane.b32.xlu0 %v1057, 80
      %v1060 = vpop.permute.xlu0 %1059
      %s1062 = scalar_lea.vmem %s413, %s972
      %1063 = vst.msk [vmem:[%s1062] sm:$0xff] %vm475, %v1060
      %s1064 = smul.u32 %s582, 5
      %s1065 = sadd.s32 %s580, %s1064
      %s1066 = smul.u32 %s1065, 8
      %s1067 = scalar_lea.vmem [#allocation2], %s1066
      %v1068 = vld [vmem:[%s1067] sm:$0xff]
      %v1069 = vpack.c.bf16 %v1055, %v1055
      %1071 = vrot.lane.b32.xlu0 %v1069, 80
      %v1072 = vpop.permute.xlu0 %1071
      %v1074 = vsel %vm475, %v1072, 0
      %1076 = vmatprep.subr.bf16.mxu0 0
      %1077 = vmatpush1.bf16.msra.mxu0 0
      %1078 = vmatprep.subr.bf16.mxu0 0
      %1079 = vmatpush1.bf16.msra.mxu0 0
      %1080 = vmatprep.subr.bf16.mxu0 0
      %1081 = vmatpush1.bf16.msra.mxu0 0
      %1082 = vmatprep.subr.bf16.mxu0 0
      %1083 = vmatpush1.bf16.msra.mxu0 0
      %1084 = vmatprep.subr.bf16.mxu0 0
      %1085 = vmatpush1.bf16.msra.mxu0 0
      %1086 = vmatprep.subr.bf16.mxu0 0
      %1087 = vmatpush1.bf16.msra.mxu0 0
      %1088 = vmatprep.subr.bf16.mxu0 0
      %1089 = vmatpush1.bf16.msra.mxu0 0
      %1090 = vmatprep.subr.bf16.mxu0 0
      %1091 = vmatpush1.bf16.msra.mxu0 %v594
      %1092 = vmatprep.subr.bf16.mxu0 0
      %1093 = vmatpush2.bf16.msra.mxu0 0
      %1094 = vmatprep.subr.bf16.mxu0 0
      %1095 = vmatpush2.bf16.msra.mxu0 0
      %1096 = vmatprep.subr.bf16.mxu0 0
      %1097 = vmatpush2.bf16.msra.mxu0 0
      %1098 = vmatprep.subr.bf16.mxu0 0
      %1099 = vmatpush2.bf16.msra.mxu0 0
      %1100 = vmatprep.subr.bf16.mxu0 0
      %1101 = vmatpush2.bf16.msra.mxu0 0
      %1102 = vmatprep.subr.bf16.mxu0 0
      %1103 = vmatpush2.bf16.msra.mxu0 0
      %1104 = vmatprep.subr.bf16.mxu0 0
      %1105 = vmatpush2.bf16.msra.mxu0 0
      %1106 = vmatprep.subr.bf16.mxu0 0
      %1107 = vmatpush2.bf16.msra.mxu0 0
      %1108 = vmatprep.mubr.bf16.mxu0 0
      %1109 = vmatmul.mubr.bf16.gmra.mxu0 %v1074
      %v1110 = vpop.f32.mrf.mxu0
      %v1111 = vadd.f32 0.0, %v1110
      %v1112 = vpop.f32.mrf.mxu0
      %v1113 = vpop.f32.mrf.mxu0
      %v1114 = vpop.f32.mrf.mxu0
      %1115 = vdwg.mxu0
      %v1116 = vadd.f32 %v1068, %v1111
      %v1117 = vxor.u32 %v1116, 2147483648
      %v1118 = vmul.f32 %v1117, 1.442695
      %v1119 = vpow.pop %v1118
      %v1120 = vadd.f32 %v1119, 1.0
      %v1121 = vrcp.pop %v1120
      %v1122 = vmul.f32 1.0, %v1121
      %v1123 = vtanh.pop %v1116
      %v1124 = vmul.f32 %v1122, %v1056
      %1126 = vrot.lane.b32.xlu0 %v1123, 96
      %v1127 = vpop.permute.xlu0 %1126
      %v1129 = vmul.f32 %v1122, %v1127
      %1131 = vrot.lane.b32.xlu0 %v1129, 16
      %v1132 = vpop.permute.xlu0 %1131
      %v1134 = vadd.f32 %v1124, %v1132
      %v1135 = vtanh.pop %v1134
      %1137 = vrot.lane.b32.xlu0 %v1135, 32
      %v1138 = vpop.permute.xlu0 %1137
      %v1140 = vmul.f32 %v1122, %v1138
      %s1141 = sadd.s32 %s583, %s1065
      %v1142 = vstv %s1141
      %vm1143 = vcmp.lt.s32.totalorder %v1142, %v579
      %v1144 = vsel %vm1143, 1, 0
      %1145 = vset.pattern.permute.xlu0 0
      %1146 = vperm.xlu0 %1145, %v1144
      %v1147 = vpop.permute.xlu0 %1146
      %vm1148 = vcmp.eq.s32.totalorder %v1147, 1
      %v1149 = vsel %vm1148, %v1140, %v1055
      %v1150 = vsel %vm1148, %v1134, %v1056
      %v1151 = vsel %vm1148, %v1140, 0.0
      %1153 = vrot.lane.b32.xlu0 %v1151, 80
      %v1154 = vpop.permute.xlu0 %1153
      %s1156 = scalar_lea.vmem %s413, %s1066
      %1157 = vst.msk [vmem:[%s1156] sm:$0xff] %vm475, %v1154
      %s1158 = smul.u32 %s582, 6
      %s1159 = sadd.s32 %s580, %s1158
      %s1160 = smul.u32 %s1159, 8
      %s1161 = scalar_lea.vmem [#allocation2], %s1160
      %v1162 = vld [vmem:[%s1161] sm:$0xff]
      %v1163 = vpack.c.bf16 %v1149, %v1149
      %1165 = vrot.lane.b32.xlu0 %v1163, 80
      %v1166 = vpop.permute.xlu0 %1165
      %v1168 = vsel %vm475, %v1166, 0
      %1170 = vmatprep.subr.bf16.mxu0 0
      %1171 = vmatpush1.bf16.msra.mxu0 0
      %1172 = vmatprep.subr.bf16.mxu0 0
      %1173 = vmatpush1.bf16.msra.mxu0 0
      %1174 = vmatprep.subr.bf16.mxu0 0
      %1175 = vmatpush1.bf16.msra.mxu0 0
      %1176 = vmatprep.subr.bf16.mxu0 0
      %1177 = vmatpush1.bf16.msra.mxu0 0
      %1178 = vmatprep.subr.bf16.mxu0 0
      %1179 = vmatpush1.bf16.msra.mxu0 0
      %1180 = vmatprep.subr.bf16.mxu0 0
      %1181 = vmatpush1.bf16.msra.mxu0 0
      %1182 = vmatprep.subr.bf16.mxu0 0
      %1183 = vmatpush1.bf16.msra.mxu0 0
      %1184 = vmatprep.subr.bf16.mxu0 0
      %1185 = vmatpush1.bf16.msra.mxu0 %v594
      %1186 = vmatprep.subr.bf16.mxu0 0
      %1187 = vmatpush2.bf16.msra.mxu0 0
      %1188 = vmatprep.subr.bf16.mxu0 0
      %1189 = vmatpush2.bf16.msra.mxu0 0
      %1190 = vmatprep.subr.bf16.mxu0 0
      %1191 = vmatpush2.bf16.msra.mxu0 0
      %1192 = vmatprep.subr.bf16.mxu0 0
      %1193 = vmatpush2.bf16.msra.mxu0 0
      %1194 = vmatprep.subr.bf16.mxu0 0
      %1195 = vmatpush2.bf16.msra.mxu0 0
      %1196 = vmatprep.subr.bf16.mxu0 0
      %1197 = vmatpush2.bf16.msra.mxu0 0
      %1198 = vmatprep.subr.bf16.mxu0 0
      %1199 = vmatpush2.bf16.msra.mxu0 0
      %1200 = vmatprep.subr.bf16.mxu0 0
      %1201 = vmatpush2.bf16.msra.mxu0 0
      %1202 = vmatprep.mubr.bf16.mxu0 0
      %1203 = vmatmul.mubr.bf16.gmra.mxu0 %v1168
      %v1204 = vpop.f32.mrf.mxu0
      %v1205 = vadd.f32 0.0, %v1204
      %v1206 = vpop.f32.mrf.mxu0
      %v1207 = vpop.f32.mrf.mxu0
      %v1208 = vpop.f32.mrf.mxu0
      %1209 = vdwg.mxu0
      %v1210 = vadd.f32 %v1162, %v1205
      %v1211 = vxor.u32 %v1210, 2147483648
      %v1212 = vmul.f32 %v1211, 1.442695
      %v1213 = vpow.pop %v1212
      %v1214 = vadd.f32 %v1213, 1.0
      %v1215 = vrcp.pop %v1214
      %v1216 = vmul.f32 1.0, %v1215
      %v1217 = vtanh.pop %v1210
      %v1218 = vmul.f32 %v1216, %v1150
      %1220 = vrot.lane.b32.xlu0 %v1217, 96
      %v1221 = vpop.permute.xlu0 %1220
      %v1223 = vmul.f32 %v1216, %v1221
      %1225 = vrot.lane.b32.xlu0 %v1223, 16
      %v1226 = vpop.permute.xlu0 %1225
      %v1228 = vadd.f32 %v1218, %v1226
      %v1229 = vtanh.pop %v1228
      %1231 = vrot.lane.b32.xlu0 %v1229, 32
      %v1232 = vpop.permute.xlu0 %1231
      %v1234 = vmul.f32 %v1216, %v1232
      %s1235 = sadd.s32 %s583, %s1159
      %v1236 = vstv %s1235
      %vm1237 = vcmp.lt.s32.totalorder %v1236, %v579
      %v1238 = vsel %vm1237, 1, 0
      %1239 = vset.pattern.permute.xlu0 0
      %1240 = vperm.xlu0 %1239, %v1238
      %v1241 = vpop.permute.xlu0 %1240
      %vm1242 = vcmp.eq.s32.totalorder %v1241, 1
      %v1243 = vsel %vm1242, %v1234, %v1149
      %v1244 = vsel %vm1242, %v1228, %v1150
      %v1245 = vsel %vm1242, %v1234, 0.0
      %1247 = vrot.lane.b32.xlu0 %v1245, 80
      %v1248 = vpop.permute.xlu0 %1247
      %s1250 = scalar_lea.vmem %s413, %s1160
      %1251 = vst.msk [vmem:[%s1250] sm:$0xff] %vm475, %v1248
      %s1252 = smul.u32 %s582, 7
      %s1253 = sadd.s32 %s580, %s1252
      %s1254 = smul.u32 %s1253, 8
      %s1255 = scalar_lea.vmem [#allocation2], %s1254
      %v1256 = vld [vmem:[%s1255] sm:$0xff]
      %v1257 = vpack.c.bf16 %v1243, %v1243
      %1259 = vrot.lane.b32.xlu0 %v1257, 80
      %v1260 = vpop.permute.xlu0 %1259
      %v1262 = vsel %vm475, %v1260, 0
      %1264 = vmatprep.subr.bf16.mxu0 0
      %1265 = vmatpush1.bf16.msra.mxu0 0
      %1266 = vmatprep.subr.bf16.mxu0 0
      %1267 = vmatpush1.bf16.msra.mxu0 0
      %1268 = vmatprep.subr.bf16.mxu0 0
      %1269 = vmatpush1.bf16.msra.mxu0 0
      %1270 = vmatprep.subr.bf16.mxu0 0
      %1271 = vmatpush1.bf16.msra.mxu0 0
      %1272 = vmatprep.subr.bf16.mxu0 0
      %1273 = vmatpush1.bf16.msra.mxu0 0
      %1274 = vmatprep.subr.bf16.mxu0 0
      %1275 = vmatpush1.bf16.msra.mxu0 0
      %1276 = vmatprep.subr.bf16.mxu0 0
      %1277 = vmatpush1.bf16.msra.mxu0 0
      %1278 = vmatprep.subr.bf16.mxu0 0
      %1279 = vmatpush1.bf16.msra.mxu0 %v594
      %1280 = vmatprep.subr.bf16.mxu0 0
      %1281 = vmatpush2.bf16.msra.mxu0 0
      %1282 = vmatprep.subr.bf16.mxu0 0
      %1283 = vmatpush2.bf16.msra.mxu0 0
      %1284 = vmatprep.subr.bf16.mxu0 0
      %1285 = vmatpush2.bf16.msra.mxu0 0
      %1286 = vmatprep.subr.bf16.mxu0 0
      %1287 = vmatpush2.bf16.msra.mxu0 0
      %1288 = vmatprep.subr.bf16.mxu0 0
      %1289 = vmatpush2.bf16.msra.mxu0 0
      %1290 = vmatprep.subr.bf16.mxu0 0
      %1291 = vmatpush2.bf16.msra.mxu0 0
      %1292 = vmatprep.subr.bf16.mxu0 0
      %1293 = vmatpush2.bf16.msra.mxu0 0
      %1294 = vmatprep.subr.bf16.mxu0 0
      %1295 = vmatpush2.bf16.msra.mxu0 0
      %1296 = vmatprep.mubr.bf16.mxu0 0
      %1297 = vmatmul.mubr.bf16.gmra.mxu0 %v1262
      %v1298 = vpop.f32.mrf.mxu0
      %v1299 = vadd.f32 0.0, %v1298
      %v1300 = vpop.f32.mrf.mxu0
      %v1301 = vpop.f32.mrf.mxu0
      %v1302 = vpop.f32.mrf.mxu0
      %1303 = vdwg.mxu0
      %v1304 = vadd.f32 %v1256, %v1299
      %v1305 = vxor.u32 %v1304, 2147483648
      %v1306 = vmul.f32 %v1305, 1.442695
      %v1307 = vpow.pop %v1306
      %v1308 = vadd.f32 %v1307, 1.0
      %v1309 = vrcp.pop %v1308
      %v1310 = vmul.f32 1.0, %v1309
      %v1311 = vtanh.pop %v1304
      %v1312 = vmul.f32 %v1310, %v1244
      %1314 = vrot.lane.b32.xlu0 %v1311, 96
      %v1315 = vpop.permute.xlu0 %1314
      %v1317 = vmul.f32 %v1310, %v1315
      %1319 = vrot.lane.b32.xlu0 %v1317, 16
      %v1320 = vpop.permute.xlu0 %1319
      %v1322 = vadd.f32 %v1312, %v1320
      %v1323 = vtanh.pop %v1322
      %1325 = vrot.lane.b32.xlu0 %v1323, 32
      %v1326 = vpop.permute.xlu0 %1325
      %v1328 = vmul.f32 %v1310, %v1326
      %s1329 = sadd.s32 %s583, %s1253
      %v1330 = vstv %s1329
      %vm1331 = vcmp.lt.s32.totalorder %v1330, %v579
      %v1332 = vsel %vm1331, 1, 0
      %1333 = vset.pattern.permute.xlu0 0
      %1334 = vperm.xlu0 %1333, %v1332
      %v1335 = vpop.permute.xlu0 %1334
      %vm1336 = vcmp.eq.s32.totalorder %v1335, 1
      %v1337 = vsel %vm1336, %v1328, %v1243
      %v1338 = vsel %vm1336, %v1322, %v1244
      %v1339 = vsel %vm1336, %v1328, 0.0
      %1341 = vrot.lane.b32.xlu0 %v1339, 80
      %v1342 = vpop.permute.xlu0 %1341
      %s1344 = scalar_lea.vmem %s413, %s1254
      %1345 = vst.msk [vmem:[%s1344] sm:$0xff] %vm475, %v1342
      %1347 = vrot.lane.b32.xlu0 %v1337, 80
      %v1348 = vpop.permute.xlu0 %1347
      %1350 = vst.msk [vmem:[#allocation3] sm:$0xff] %vm475, %v1348
      %1352 = vrot.lane.b32.xlu0 %v1338, 112
      %v1353 = vpop.permute.xlu0 %1352
      %1355 = vst.msk [vmem:[#allocation4] sm:$0xff] %vm475, %v1353
      // Predicated region
      $region45: #{lstm_encoder_forward.1} parent=39 // pred_check
        %p1356 = pneg %p432
      $region46: #{lstm_encoder_forward.1} parent=39 // pred_check_branch
        %1358 = sbr.rel (%p1356) target = $region48
      $region47: #{lstm_encoder_forward.1} parent=39 // pred_region
        %1359 = vst.msk [vmem:[%s422] sm:$0xff] %vm475, %v1348
        %1360 = vst.msk [vmem:[%s426] sm:$0xff] %vm475, %v1353
      $region48: #{lstm_encoder_forward.1} parent=39 // pred_fallthru
        _
      %s1361 = smul.u32 %s24, 2
      %s1362 = ssub.s32 0, %s1361
      %s1363 = smul.u32 %s23, %s1362
      %s1364 = sadd.s32 %s24, %s1363
      %s1365 = smul.u32 8, %s1364
      %p1366 = scmp.lt.s32.totalorder %s23, 1
      %s1367 = scalar_select %p1366, %s23, 1
      %p1368 = scmp.lt.s32.totalorder %s1365, 7
      %s1369 = scalar_select %p1368, %s1365, 7
      %s1370 = smul.addr %s1367, 8
      %s1371 = sadd.s32 %s1369, %s1370
      %s1372 = smul.addr %s1371, 8
      %s1373 = scalar_lea.vmem %s5, %s1372
      %p1374 = scmp.lt.s32.totalorder %s23, 1
      %s1375 = scalar_select %p1374, %s23, 1
      %s1376 = smul.addr %s1375, 8
      %s1377 = scalar_lea.vmem %s6, %s1376
      %p1378 = scmp.lt.s32.totalorder %s23, 1
      %s1379 = scalar_select %p1378, %s23, 1
      %s1380 = smul.addr %s1379, 8
      %s1381 = scalar_lea.vmem %s7, %s1380
      // Predicated region
      $region49: #{lstm_encoder_forward.1} parent=39 // pred_check
        %p1382 = pneg %p192
      $region50: #{lstm_encoder_forward.1} parent=39 // pred_check_branch
        %1384 = sbr.rel (%p1382) target = $region52
      $region51: #{lstm_encoder_forward.1} parent=39 // pred_region
        %s1385 = smul.u32 %s24, 2
        %s1386 = ssub.s32 0, %s1385
        %s1387 = smul.u32 %s23, %s1386
        %s1388 = sadd.s32 %s24, %s1387
        %s1389 = smul.u32 8, %s1388
      $region52: #{lstm_encoder_forward.1} parent=39 // pred_fallthru
        _
      // Predicated region
      $region53: #{lstm_encoder_forward.1} parent=39 // pred_check
        %p1390 = pneg %p218
      $region54: #{lstm_encoder_forward.1} parent=39 // pred_check_branch
        %1392 = sbr.rel (%p1390) target = $region56
      $region55: #{lstm_encoder_forward.1} parent=39 // pred_region
        _
      $region56: #{lstm_encoder_forward.1} parent=39 // pred_fallthru
        _
      // Predicated region
      $region57: #{lstm_encoder_forward.1} parent=39 // pred_check
        %p1393 = pneg %p244
      $region58: #{lstm_encoder_forward.1} parent=39 // pred_check_branch
        %1395 = sbr.rel (%p1393) target = $region60
      $region59: #{lstm_encoder_forward.1} parent=39 // pred_region
        _
      $region60: #{lstm_encoder_forward.1} parent=39 // pred_fallthru
        _
    $region40: #{lstm_encoder_forward.1} parent=5 // pred_fallthru
      _
    %p1396 = scmp.le.s32.totalorder 2, %s14
    // Predicated region
    $region61: #{lstm_encoder_forward.1} parent=5 // pred_check
      %p1397 = pneg %p1396
    $region62: #{lstm_encoder_forward.1} parent=5 // pred_check_branch
      %1399 = sbr.rel (%p1397) target = $region64
    $region63: #{lstm_encoder_forward.1} parent=5 // pred_region
      %s1400 = ssub.s32 %s14, 2
      // Predicated region
      $region65: #{lstm_encoder_forward.1} parent=63 // pred_check
        %p1401 = pneg %p198
      $region66: #{lstm_encoder_forward.1} parent=63 // pred_check_branch
        %1403 = sbr.rel (%p1401) target = $region68
      $region67: #{lstm_encoder_forward.1} parent=63 // pred_region
        %s1404 = smul.u32 %s26, 2
        %s1405 = ssub.s32 0, %s1404
        %s1406 = smul.u32 %s25, %s1405
        %s1407 = sadd.s32 %s26, %s1406
        %s1408 = smul.u32 8, %s1407
        %p1409 = scmp.lt.s32.totalorder %s25, 1
        %s1410 = scalar_select %p1409, %s25, 1
        %p1411 = scmp.lt.s32.totalorder %s1408, 7
        %s1412 = scalar_select %p1411, %s1408, 7
        %s1413 = smul.addr %s1410, 8
        %s1414 = sadd.s32 %s1412, %s1413
        %s1415 = smul.addr %s1414, 8
        %s1416 = scalar_lea.vmem %s5, %s1415
      $region68: #{lstm_encoder_forward.1} parent=63 // pred_fallthru
        _
      // Predicated region
      $region69: #{lstm_encoder_forward.1} parent=63 // pred_check
        %p1417 = pneg %p224
      $region70: #{lstm_encoder_forward.1} parent=63 // pred_check_branch
        %1419 = sbr.rel (%p1417) target = $region72
      $region71: #{lstm_encoder_forward.1} parent=63 // pred_region
        %p1420 = scmp.lt.s32.totalorder %s25, 1
        %s1421 = scalar_select %p1420, %s25, 1
        %s1422 = smul.addr %s1421, 8
        %s1423 = scalar_lea.vmem %s6, %s1422
      $region72: #{lstm_encoder_forward.1} parent=63 // pred_fallthru
        _
      // Predicated region
      $region73: #{lstm_encoder_forward.1} parent=63 // pred_check
        %p1424 = pneg %p250
      $region74: #{lstm_encoder_forward.1} parent=63 // pred_check_branch
        %1426 = sbr.rel (%p1424) target = $region76
      $region75: #{lstm_encoder_forward.1} parent=63 // pred_region
        %p1427 = scmp.lt.s32.totalorder %s25, 1
        %s1428 = scalar_select %p1427, %s25, 1
        %s1429 = smul.addr %s1428, 8
        %s1430 = scalar_lea.vmem %s7, %s1429
      $region76: #{lstm_encoder_forward.1} parent=63 // pred_fallthru
        _
    $region64: #{lstm_encoder_forward.1} parent=5 // pred_fallthru
      _
  $region6: #{lstm_encoder_forward.1} parent=0 // loop_footer
    %s18 = sadd.s32 1, %s14
  $region7: #{lstm_encoder_forward.1} parent=0 // loop_footer_branch
    %13 = sbr.rel target = $region3
  $region8: #{lstm_encoder_forward.1} parent=0 // loop_exit
    _

</llo_original>
